<compile_context>
chip_gen: v7x
topology: tpu7x:2x2x1
jax: 0.10.0
libtpu: 0.0.40
codegen_flags: <defaults>
</compile_context>

<pallas_src>
import math
import numpy as np
import jax
import jax.numpy as jnp
from jax.experimental import pallas as pl
from jax.experimental.pallas import tpu as pltpu

# ---- static config (matches the module hyper-parameters) --------------------
B = 2            # batch
T = 8            # num_token (== context_length)
D_IN = 32        # d_in
D_OUT = 32       # d_out
NUM_HEADS = 4
HEAD_DIM = D_OUT // NUM_HEADS
IS_CAUSAL = False            # module default
SCALE = 1.0 / math.sqrt(HEAD_DIM)
BT = B * T


def _heads_to_batch(m2d):
    """(B*T, D_OUT) -> (NUM_HEADS*B, T, HEAD_DIM), head-major leading axis."""
    return jnp.concatenate(
        [m2d[:, h * HEAD_DIM:(h + 1) * HEAD_DIM].reshape(B, T, HEAD_DIM)
         for h in range(NUM_HEADS)],
        axis=0)


def _batch_to_lanes(m3d):
    """(NUM_HEADS*B, T, X) -> (B, T, NUM_HEADS*X), heads concatenated on lanes."""
    return jnp.concatenate(
        [m3d[h * B:(h + 1) * B] for h in range(NUM_HEADS)], axis=-1)


def mha_kernel(x_ref, wqkv_ref, wo_ref, bo_ref, out_ref, attw_ref):
    # x_ref:    (B*T, D_IN)
    # wqkv_ref: (D_IN, 3*D_OUT)   fused, pre-transposed, Wq pre-scaled by SCALE
    # wo_ref:   (D_OUT, D_OUT)    pre-transposed out_proj weight
    # bo_ref:   (1, D_OUT)        out_proj bias
    # out_ref:  (B*T, D_OUT)
    # attw_ref: (B, T, NUM_HEADS*T)  lane-dense attention-weight slab
    x = x_ref[...]                                                     # (BT, D_IN)

    # Single fused QKV projection.
    qkv = jnp.dot(x, wqkv_ref[...], preferred_element_type=jnp.float32)  # (BT, 3*D_OUT)
    q = _heads_to_batch(qkv[:, :D_OUT])                                  # (H*B, T, hd)
    k = _heads_to_batch(qkv[:, D_OUT:2 * D_OUT])
    v = _heads_to_batch(qkv[:, 2 * D_OUT:])

    # Scores for all (head, batch) pairs in one batched einsum; already scaled
    # because SCALE was folded into the query weight.
    s = jnp.einsum("bid,bjd->bij", q, k,
                   preferred_element_type=jnp.float32)                   # (H*B, T, T)
    if IS_CAUSAL:
        row = jax.lax.broadcasted_iota(jnp.int32, s.shape, 1)
        col = jax.lax.broadcasted_iota(jnp.int32, s.shape, 2)
        s = jnp.where(col <= row, s, -jnp.inf)

    # Numerically-stable softmax over the last axis.
    s = s - jnp.max(s, axis=-1, keepdims=True)
    e = jnp.exp(s)
    w = e * pl.reciprocal(jnp.sum(e, axis=-1, keepdims=True), approx=False)

    # Single lane-dense store of all attention weights.
    attw_ref[...] = _batch_to_lanes(w)                                   # (B, T, H*T)

    # Context for all heads in one batched einsum, then ONE output projection.
    ctx = jnp.einsum("bij,bjd->bid", w, v,
                     preferred_element_type=jnp.float32)                 # (H*B, T, hd)
    ctx2 = _batch_to_lanes(ctx).reshape(BT, D_OUT)                       # (BT, D_OUT)
    out_ref[...] = (jnp.dot(ctx2, wo_ref[...],
                            preferred_element_type=jnp.float32)
                    + bo_ref[...])


def multi_head_attention(x, wq, wk, wv, wo, bo):
    # Host-side weight prep: fuse + pre-transpose, fold softmax scale into Wq.
    wqkv_t = jnp.concatenate([(wq * SCALE).T, wk.T, wv.T], axis=1)   # (D_IN, 3*D_OUT)
    wo_t = wo.T                                                      # (D_OUT, D_OUT)
    x2d = x.reshape(BT, D_IN)

    vmem = pl.BlockSpec(memory_space=pltpu.MemorySpace.VMEM)
    out2d, attw_slab = pl.pallas_call(
        mha_kernel,
        out_shape=(
            jax.ShapeDtypeStruct((BT, D_OUT), jnp.float32),
            jax.ShapeDtypeStruct((B, T, NUM_HEADS * T), jnp.float32),
        ),
        in_specs=[vmem, vmem, vmem, vmem],
        out_specs=(vmem, vmem),
    )(x2d, wqkv_t, wo_t, bo)

    out = out2d.reshape(B, T, D_OUT)
    attw = attw_slab.reshape(B, T, NUM_HEADS, T).transpose(0, 2, 1, 3)
    return out, attw


def reference(x, wq, wk, wv, wo, bo):
    q = x @ wq.T
    k = x @ wk.T
    v = x @ wv.T

    def split(t):  # (B, T, D_OUT) -> (B, H, T, hd)
        return t.reshape(B, T, NUM_HEADS, HEAD_DIM).transpose(0, 2, 1, 3)

    q, k, v = split(q), split(k), split(v)
    s = jnp.einsum("bhid,bhjd->bhij", q, k)
    if IS_CAUSAL:
        mask = jnp.tril(jnp.ones((T, T)))
        s = jnp.where(mask == 0, -jnp.inf, s)
    w = jax.nn.softmax(s * SCALE, axis=-1)
    ctx = jnp.einsum("bhij,bhjd->bhid", w, v)
    ctx = ctx.transpose(0, 2, 1, 3).reshape(B, T, D_OUT)
    return ctx @ wo.T + bo[0], w


if __name__ == "__main__":
    key = jax.random.PRNGKey(0)
    kx, kq, kk, kv, ko, kb = jax.random.split(key, 6)

    x = jax.random.normal(kx, (B, T, D_IN), dtype=jnp.float32)

    # Deterministic PyTorch-style init: U(-1/sqrt(fan_in), 1/sqrt(fan_in))
    lim_in = 1.0 / math.sqrt(D_IN)
    lim_out = 1.0 / math.sqrt(D_OUT)
    wq = jax.random.uniform(kq, (D_OUT, D_IN), minval=-lim_in, maxval=lim_in)
    wk = jax.random.uniform(kk, (D_OUT, D_IN), minval=-lim_in, maxval=lim_in)
    wv = jax.random.uniform(kv, (D_OUT, D_IN), minval=-lim_in, maxval=lim_in)
    wo = jax.random.uniform(ko, (D_OUT, D_OUT), minval=-lim_out, maxval=lim_out)
    bo = jax.random.uniform(kb, (1, D_OUT), minval=-lim_out, maxval=lim_out)

    out, attw = multi_head_attention(x, wq, wk, wv, wo, bo)
    jax.block_until_ready((out, attw))

    out_ref, attw_ref = reference(x, wq, wk, wv, wo, bo)
    assert out.shape == (B, T, D_OUT) and attw.shape == (B, NUM_HEADS, T, T)
    np.testing.assert_allclose(np.asarray(out), np.asarray(out_ref),
                               rtol=1e-5, atol=1e-5)
    np.testing.assert_allclose(np.asarray(attw), np.asarray(attw_ref),
                               rtol=1e-5, atol=1e-5)
    print("KERNEL_OK")
</pallas_src>

<mosaic_0001>
module attributes {stable_mosaic.version = 11 : i64} {
  func.func @mha_kernel(%arg0: memref<16x32xf32, #tpu.memory_space<vmem>>, %arg1: memref<32x96xf32, #tpu.memory_space<vmem>>, %arg2: memref<32x32xf32, #tpu.memory_space<vmem>>, %arg3: memref<1x32xf32, #tpu.memory_space<vmem>>, %arg4: memref<16x32xf32, #tpu.memory_space<vmem>>, %arg5: memref<2x8x32xf32, #tpu.memory_space<vmem>>) attributes {dimension_semantics = [], scalar_prefetch = 0 : i64, scratch_operands = 0 : i64, tpu.core_type = #tpu.core_type<tc>} {
    %c0 = arith.constant 0 : index
    %c0_0 = arith.constant 0 : index
    %0 = vector.load %arg0[%c0, %c0_0] : memref<16x32xf32, #tpu.memory_space<vmem>>, vector<16x32xf32>
    %c0_1 = arith.constant 0 : index
    %c0_2 = arith.constant 0 : index
    %1 = vector.load %arg1[%c0_1, %c0_2] : memref<32x96xf32, #tpu.memory_space<vmem>>, vector<32x96xf32>
    %cst = arith.constant dense<0.000000e+00> : vector<16x96xf32>
    %2 = tpu.matmul %0, %1, %cst {dimension_numbers = #tpu.dot_dimension_numbers<[1], [0], [0], [1], [0, 0, 1, 1], [], []>} : vector<16x32xf32>, vector<32x96xf32>, vector<16x96xf32> -> vector<16x96xf32>
    %3 = vector.extract_strided_slice %2 {offsets = [0, 0], sizes = [16, 32], strides = [1, 1]} : vector<16x96xf32> to vector<16x32xf32>
    %4 = vector.extract_strided_slice %3 {offsets = [0, 0], sizes = [16, 8], strides = [1, 1]} : vector<16x32xf32> to vector<16x8xf32>
    %5 = vector.shape_cast %4 : vector<16x8xf32> to vector<2x8x8xf32>
    %6 = vector.extract_strided_slice %3 {offsets = [0, 8], sizes = [16, 8], strides = [1, 1]} : vector<16x32xf32> to vector<16x8xf32>
    %7 = vector.shape_cast %6 : vector<16x8xf32> to vector<2x8x8xf32>
    %8 = vector.extract_strided_slice %3 {offsets = [0, 16], sizes = [16, 8], strides = [1, 1]} : vector<16x32xf32> to vector<16x8xf32>
    %9 = vector.shape_cast %8 : vector<16x8xf32> to vector<2x8x8xf32>
    %10 = vector.extract_strided_slice %3 {offsets = [0, 24], sizes = [16, 8], strides = [1, 1]} : vector<16x32xf32> to vector<16x8xf32>
    %11 = vector.shape_cast %10 : vector<16x8xf32> to vector<2x8x8xf32>
    %12 = tpu.concatenate %5, %7, %9, %11 in 0 : vector<2x8x8xf32>, vector<2x8x8xf32>, vector<2x8x8xf32>, vector<2x8x8xf32> -> vector<8x8x8xf32>
    %13 = vector.extract_strided_slice %2 {offsets = [0, 32], sizes = [16, 32], strides = [1, 1]} : vector<16x96xf32> to vector<16x32xf32>
    %14 = vector.extract_strided_slice %13 {offsets = [0, 0], sizes = [16, 8], strides = [1, 1]} : vector<16x32xf32> to vector<16x8xf32>
    %15 = vector.shape_cast %14 : vector<16x8xf32> to vector<2x8x8xf32>
    %16 = vector.extract_strided_slice %13 {offsets = [0, 8], sizes = [16, 8], strides = [1, 1]} : vector<16x32xf32> to vector<16x8xf32>
    %17 = vector.shape_cast %16 : vector<16x8xf32> to vector<2x8x8xf32>
    %18 = vector.extract_strided_slice %13 {offsets = [0, 16], sizes = [16, 8], strides = [1, 1]} : vector<16x32xf32> to vector<16x8xf32>
    %19 = vector.shape_cast %18 : vector<16x8xf32> to vector<2x8x8xf32>
    %20 = vector.extract_strided_slice %13 {offsets = [0, 24], sizes = [16, 8], strides = [1, 1]} : vector<16x32xf32> to vector<16x8xf32>
    %21 = vector.shape_cast %20 : vector<16x8xf32> to vector<2x8x8xf32>
    %22 = tpu.concatenate %15, %17, %19, %21 in 0 : vector<2x8x8xf32>, vector<2x8x8xf32>, vector<2x8x8xf32>, vector<2x8x8xf32> -> vector<8x8x8xf32>
    %23 = vector.extract_strided_slice %2 {offsets = [0, 64], sizes = [16, 32], strides = [1, 1]} : vector<16x96xf32> to vector<16x32xf32>
    %24 = vector.extract_strided_slice %23 {offsets = [0, 0], sizes = [16, 8], strides = [1, 1]} : vector<16x32xf32> to vector<16x8xf32>
    %25 = vector.shape_cast %24 : vector<16x8xf32> to vector<2x8x8xf32>
    %26 = vector.extract_strided_slice %23 {offsets = [0, 8], sizes = [16, 8], strides = [1, 1]} : vector<16x32xf32> to vector<16x8xf32>
    %27 = vector.shape_cast %26 : vector<16x8xf32> to vector<2x8x8xf32>
    %28 = vector.extract_strided_slice %23 {offsets = [0, 16], sizes = [16, 8], strides = [1, 1]} : vector<16x32xf32> to vector<16x8xf32>
    %29 = vector.shape_cast %28 : vector<16x8xf32> to vector<2x8x8xf32>
    %30 = vector.extract_strided_slice %23 {offsets = [0, 24], sizes = [16, 8], strides = [1, 1]} : vector<16x32xf32> to vector<16x8xf32>
    %31 = vector.shape_cast %30 : vector<16x8xf32> to vector<2x8x8xf32>
    %32 = tpu.concatenate %25, %27, %29, %31 in 0 : vector<2x8x8xf32>, vector<2x8x8xf32>, vector<2x8x8xf32>, vector<2x8x8xf32> -> vector<8x8x8xf32>
    "tpu.trace_start"() <{level = 10 : i32, message = "bid,bjd->bij"}> : () -> ()
    %cst_3 = arith.constant dense<0.000000e+00> : vector<8x8x8xf32>
    %33 = tpu.matmul %12, %22, %cst_3 {dimension_numbers = #tpu.dot_dimension_numbers<[2], [2], [1], [1], [0, 0, 0, 1, 1, 1], [0], [0]>} : vector<8x8x8xf32>, vector<8x8x8xf32>, vector<8x8x8xf32> -> vector<8x8x8xf32>
    "tpu.trace_stop"() : () -> ()
    %cst_4 = arith.constant dense<0xFF800000> : vector<8x8xf32>
    %34 = vector.multi_reduction <maximumf>, %33, %cst_4 [2] : vector<8x8x8xf32> to vector<8x8xf32>
    %35 = vector.shape_cast %34 : vector<8x8xf32> to vector<8x8x1xf32>
    %36 = vector.broadcast %35 : vector<8x8x1xf32> to vector<8x8x8xf32>
    %37 = arith.subf %33, %36 : vector<8x8x8xf32>
    %38 = math.exp %37 : vector<8x8x8xf32>
    %cst_5 = arith.constant dense<0.000000e+00> : vector<8x8xf32>
    %39 = vector.multi_reduction <add>, %38, %cst_5 [2] : vector<8x8x8xf32> to vector<8x8xf32>
    %40 = vector.shape_cast %39 : vector<8x8xf32> to vector<8x8x1xf32>
    %41 = tpu.reciprocal %40 : vector<8x8x1xf32> -> vector<8x8x1xf32>
    %42 = vector.broadcast %41 : vector<8x8x1xf32> to vector<8x8x8xf32>
    %43 = arith.mulf %38, %42 : vector<8x8x8xf32>
    %44 = vector.extract_strided_slice %43 {offsets = [0, 0, 0], sizes = [2, 8, 8], strides = [1, 1, 1]} : vector<8x8x8xf32> to vector<2x8x8xf32>
    %45 = vector.extract_strided_slice %43 {offsets = [2, 0, 0], sizes = [2, 8, 8], strides = [1, 1, 1]} : vector<8x8x8xf32> to vector<2x8x8xf32>
    %46 = vector.extract_strided_slice %43 {offsets = [4, 0, 0], sizes = [2, 8, 8], strides = [1, 1, 1]} : vector<8x8x8xf32> to vector<2x8x8xf32>
    %47 = vector.extract_strided_slice %43 {offsets = [6, 0, 0], sizes = [2, 8, 8], strides = [1, 1, 1]} : vector<8x8x8xf32> to vector<2x8x8xf32>
    %48 = tpu.concatenate %44, %45, %46, %47 in 2 : vector<2x8x8xf32>, vector<2x8x8xf32>, vector<2x8x8xf32>, vector<2x8x8xf32> -> vector<2x8x32xf32>
    %c0_6 = arith.constant 0 : index
    %c0_7 = arith.constant 0 : index
    %c0_8 = arith.constant 0 : index
    %49 = vector.load %arg5[%c0_6, %c0_7, %c0_8] : memref<2x8x32xf32, #tpu.memory_space<vmem>>, vector<2x8x32xf32>
    tpu.vector_store %arg5[%c0_6, %c0_7, %c0_8], %48 {strides = array<i32>} : memref<2x8x32xf32, #tpu.memory_space<vmem>>, vector<2x8x32xf32>,
    "tpu.trace_start"() <{level = 10 : i32, message = "bij,bjd->bid"}> : () -> ()
    %cst_9 = arith.constant dense<0.000000e+00> : vector<8x8x8xf32>
    %50 = tpu.matmul %43, %32, %cst_9 {dimension_numbers = #tpu.dot_dimension_numbers<[2], [1], [1], [2], [0, 0, 0, 1, 1, 2], [0], [0]>} : vector<8x8x8xf32>, vector<8x8x8xf32>, vector<8x8x8xf32> -> vector<8x8x8xf32>
    "tpu.trace_stop"() : () -> ()
    %51 = vector.extract_strided_slice %50 {offsets = [0, 0, 0], sizes = [2, 8, 8], strides = [1, 1, 1]} : vector<8x8x8xf32> to vector<2x8x8xf32>
    %52 = vector.extract_strided_slice %50 {offsets = [2, 0, 0], sizes = [2, 8, 8], strides = [1, 1, 1]} : vector<8x8x8xf32> to vector<2x8x8xf32>
    %53 = vector.extract_strided_slice %50 {offsets = [4, 0, 0], sizes = [2, 8, 8], strides = [1, 1, 1]} : vector<8x8x8xf32> to vector<2x8x8xf32>
    %54 = vector.extract_strided_slice %50 {offsets = [6, 0, 0], sizes = [2, 8, 8], strides = [1, 1, 1]} : vector<8x8x8xf32> to vector<2x8x8xf32>
    %55 = tpu.concatenate %51, %52, %53, %54 in 2 : vector<2x8x8xf32>, vector<2x8x8xf32>, vector<2x8x8xf32>, vector<2x8x8xf32> -> vector<2x8x32xf32>
    %56 = vector.shape_cast %55 : vector<2x8x32xf32> to vector<16x32xf32>
    %c0_10 = arith.constant 0 : index
    %c0_11 = arith.constant 0 : index
    %57 = vector.load %arg2[%c0_10, %c0_11] : memref<32x32xf32, #tpu.memory_space<vmem>>, vector<32x32xf32>
    %cst_12 = arith.constant dense<0.000000e+00> : vector<16x32xf32>
    %58 = tpu.matmul %56, %57, %cst_12 {dimension_numbers = #tpu.dot_dimension_numbers<[1], [0], [0], [1], [0, 0, 1, 1], [], []>} : vector<16x32xf32>, vector<32x32xf32>, vector<16x32xf32> -> vector<16x32xf32>
    %c0_13 = arith.constant 0 : index
    %c0_14 = arith.constant 0 : index
    %59 = vector.load %arg3[%c0_13, %c0_14] : memref<1x32xf32, #tpu.memory_space<vmem>>, vector<1x32xf32>
    %60 = vector.broadcast %59 : vector<1x32xf32> to vector<16x32xf32>
    %61 = arith.addf %58, %60 : vector<16x32xf32>
    %c0_15 = arith.constant 0 : index
    %c0_16 = arith.constant 0 : index
    %62 = vector.load %arg4[%c0_15, %c0_16] : memref<16x32xf32, #tpu.memory_space<vmem>>, vector<16x32xf32>
    tpu.vector_store %arg4[%c0_15, %c0_16], %61 {strides = array<i32>} : memref<16x32xf32, #tpu.memory_space<vmem>>, vector<16x32xf32>,
    return
  }
}

</mosaic_0001>

<llo_original>
// kernel: tpu_custom_call.1
$region0: #{tpu_custom_call.1}
  #allocation0 [shape = 'u32[]', space=smem, size = 0x4, offset = 0x4, fixed_abs, tag = 'smem constant byte address 0x4 - core index']
  #allocation1 [shape = 'u32[144,128]{1,0:T(1,128)}', space=vmem, size = 0x12000, scoped, tag = 'internal scratch']
  %s0 = inlined_call_operand.hbm [shape: f32[16,32], index: 0, kind: input, shape index: {}]
  %s1 = inlined_call_operand.hbm [shape: f32[32,96], index: 1, kind: input, shape index: {}]
  %s2 = inlined_call_operand.hbm [shape: f32[32,32], index: 2, kind: input, shape index: {}]
  %s3 = inlined_call_operand.vmem [shape: f32[1,32], index: 3, kind: input, shape index: {}]
  %s4 = inlined_call_operand.hbm [shape: f32[16,32], index: 4, kind: output, shape index: {0}]
  %s5 = inlined_call_operand.hbm [shape: f32[2,8,32], index: 5, kind: output, shape index: {1}]
  %6 = xla_tuple %s4, %s5
  %s7 = sld [smem:[#allocation0]]
  $region46: #{tpu_custom_call.1} parent=0
    _
  %s9 = ssub.s32 1, %s7
  %s10 = scalar_select 0, %s9, %s7
  $region1: #{tpu_custom_call.1} parent=0
    #allocation2 [shape = 'u8[8192]{0}', space=vmem, size = 0x2000, scoped, tag = 'input window, operand 0, single buffered']
    #allocation3 [shape = 's32[1]{0}', space=sflag, size = 0x4, scoped, tag = 'scoped memory for tpu_custom_call.1']
    #allocation4 [shape = 's32[1]{0}', space=sflag, size = 0x4, scoped, tag = 'scoped memory for tpu_custom_call.1']
    #allocation5 [shape = 'u8[16384]{0}', space=vmem, size = 0x4000, scoped, tag = 'input window, operand 1, single buffered']
    #allocation6 [shape = 's32[1]{0}', space=sflag, size = 0x4, scoped, tag = 'scoped memory for tpu_custom_call.1']
    #allocation7 [shape = 'u8[16384]{0}', space=vmem, size = 0x4000, scoped, tag = 'input window, operand 2, single buffered']
    #allocation8 [shape = 'u8[8192]{0}', space=vmem, size = 0x2000, scoped, tag = 'output window, operand 0, single buffered']
    #allocation9 [shape = 'u8[8192]{0}', space=vmem, size = 0x2000, scoped, tag = 'output window, operand 1, single buffered']
    #allocation10 [shape = 's32[1]{0}', space=sflag, size = 0x4, scoped, tag = 'scoped memory for tpu_custom_call.1']
    %11 = vsyncpa [#allocation3], 0
    %12 = vsyncpa [#allocation6], 0
    %13 = vsyncpa [#allocation4], 0
    %14 = vsyncpa [#allocation10], 0
    // Predicated region
    $region2: #{tpu_custom_call.1} parent=1 // pred_check
      _
    $region3: #{tpu_custom_call.1} parent=1 // pred_check_branch
      %16 = sbr.rel (0) target = $region5
    $region4: #{tpu_custom_call.1} parent=1 // pred_region
      %s18 = ssub.s32 256, 256
      %19 = vsyncadd [#allocation3], %s18
      %s20 = sshll.u32 [#allocation2], 4
      %s21 = int_to_ptr.vmem [resolvable:$true] %s20
      %26 = dma.hbm_to_vmem [thread:$0]  %s0, 256, %s21, [#allocation3], 128, 128, 8
    $region5: #{tpu_custom_call.1} parent=1 // pred_fallthru
      _
    // Predicated region
    $region6: #{tpu_custom_call.1} parent=1 // pred_check
      _
    $region7: #{tpu_custom_call.1} parent=1 // pred_check_branch
      %28 = sbr.rel (0) target = $region9
    $region8: #{tpu_custom_call.1} parent=1 // pred_region
      %s30 = ssub.s32 512, 512
      %31 = vsyncadd [#allocation6], %s30
      %s32 = sshll.u32 [#allocation5], 4
      %s33 = int_to_ptr.vmem [resolvable:$true] %s32
      %38 = dma.hbm_to_vmem [thread:$0]  %s1, 512, %s33, [#allocation6], 128, 128, 8
    $region9: #{tpu_custom_call.1} parent=1 // pred_fallthru
      _
    // Predicated region
    $region10: #{tpu_custom_call.1} parent=1 // pred_check
      _
    $region11: #{tpu_custom_call.1} parent=1 // pred_check_branch
      %40 = sbr.rel (0) target = $region13
    $region12: #{tpu_custom_call.1} parent=1 // pred_region
      %s42 = ssub.s32 512, 512
      %43 = vsyncadd [#allocation6], %s42
      %s44 = sshll.u32 [#allocation7], 4
      %s45 = int_to_ptr.vmem [resolvable:$true] %s44
      %50 = dma.hbm_to_vmem [thread:$0]  %s2, 512, %s45, [#allocation6], 128, 128, 8
    $region13: #{tpu_custom_call.1} parent=1 // pred_fallthru
      _
    // Predicated region
    $region14: #{tpu_custom_call.1} parent=1 // pred_check
      _
    $region15: #{tpu_custom_call.1} parent=1 // pred_check_branch
      %52 = sbr.rel (0) target = $region17
    $region16: #{tpu_custom_call.1} parent=1 // pred_region
      _
    $region17: #{tpu_custom_call.1} parent=1 // pred_fallthru
      _
    // Predicated region
    $region18: #{tpu_custom_call.1} parent=1 // pred_check
      _
    $region19: #{tpu_custom_call.1} parent=1 // pred_check_branch
      %54 = sbr.rel (0) target = $region21
    $region20: #{tpu_custom_call.1} parent=1 // pred_region
      %55 = dma.done [#allocation3], 256
    $region21: #{tpu_custom_call.1} parent=1 // pred_fallthru
      _
    // Predicated region
    $region22: #{tpu_custom_call.1} parent=1 // pred_check
      _
    $region23: #{tpu_custom_call.1} parent=1 // pred_check_branch
      %57 = sbr.rel (0) target = $region25
    $region24: #{tpu_custom_call.1} parent=1 // pred_region
      %58 = dma.done [#allocation6], 512
    $region25: #{tpu_custom_call.1} parent=1 // pred_fallthru
      _
    // Predicated region
    $region26: #{tpu_custom_call.1} parent=1 // pred_check
      _
    $region27: #{tpu_custom_call.1} parent=1 // pred_check_branch
      %60 = sbr.rel (0) target = $region29
    $region28: #{tpu_custom_call.1} parent=1 // pred_region
      %61 = dma.done [#allocation6], 512
    $region29: #{tpu_custom_call.1} parent=1 // pred_fallthru
      _
    %v62 = vld [vmem:[#allocation2] sm:$0xff]
    %v63 = vld [vmem:[#allocation2 + $0x8] sm:$0xff]
    %v64 = vld [vmem:[#allocation5] sm:$0xff]
    %v65 = vld [vmem:[#allocation5 + $0x8] sm:$0xff]
    %v66 = vld [vmem:[#allocation5 + $0x10] sm:$0xff]
    %v67 = vld [vmem:[#allocation5 + $0x18] sm:$0xff]
    %vm68 = vcmask 261120
    %v70 = vsel %vm68, %v62, 0
    %v73 = vsel %vm68, %v63, 0
    %75 = vmatprep.subr.mxu0 0.0
    %76 = vmatpush1.msra.mxu0 %v64
    %77 = vmatprep.subr.mxu0 0.0
    %78 = vmatpush1.msra.mxu0 %v65
    %79 = vmatprep.subr.mxu0 0.0
    %80 = vmatpush1.msra.mxu0 %v66
    %81 = vmatprep.subr.mxu0 0.0
    %82 = vmatpush1.msra.mxu0 %v67
    %83 = vmatprep.subr.mxu0 0.0
    %84 = vmatpush1.msra.mxu0 0.0
    %85 = vmatprep.subr.mxu0 0.0
    %86 = vmatpush1.msra.mxu0 0.0
    %87 = vmatprep.subr.mxu0 0.0
    %88 = vmatpush1.msra.mxu0 0.0
    %89 = vmatprep.subr.mxu0 0.0
    %90 = vmatpush1.msra.mxu0 0.0
    %91 = vmatprep.subr.mxu0 0.0
    %92 = vmatpush1.msra.mxu0 0.0
    %93 = vmatprep.subr.mxu0 0.0
    %94 = vmatpush1.msra.mxu0 0.0
    %95 = vmatprep.subr.mxu0 0.0
    %96 = vmatpush1.msra.mxu0 0.0
    %97 = vmatprep.subr.mxu0 0.0
    %98 = vmatpush1.msra.mxu0 0.0
    %99 = vmatprep.subr.mxu0 0.0
    %100 = vmatpush1.msra.mxu0 0.0
    %101 = vmatprep.subr.mxu0 0.0
    %102 = vmatpush1.msra.mxu0 0.0
    %103 = vmatprep.subr.mxu0 0.0
    %104 = vmatpush1.msra.mxu0 0.0
    %105 = vmatprep.subr.mxu0 0.0
    %106 = vmatpush1.msra.mxu0 0.0
    %107 = vmatprep.subr.mxu0 0.0
    %108 = vmatpush1.msra.mxu0 0.0
    %109 = vmatprep.subr.mxu0 0.0
    %110 = vmatpush1.msra.mxu0 0.0
    %111 = vmatprep.subr.mxu0 0.0
    %112 = vmatpush1.msra.mxu0 0.0
    %113 = vmatprep.subr.mxu0 0.0
    %114 = vmatpush1.msra.mxu0 0.0
    %115 = vmatprep.subr.mxu0 0.0
    %116 = vmatpush1.msra.mxu0 0.0
    %117 = vmatprep.subr.mxu0 0.0
    %118 = vmatpush1.msra.mxu0 0.0
    %119 = vmatprep.subr.mxu0 0.0
    %120 = vmatpush1.msra.mxu0 0.0
    %121 = vmatprep.subr.mxu0 0.0
    %122 = vmatpush1.msra.mxu0 0.0
    %123 = vmatprep.subr.mxu0 0.0
    %124 = vmatpush1.msra.mxu0 0.0
    %125 = vmatprep.subr.mxu0 0.0
    %126 = vmatpush1.msra.mxu0 0.0
    %127 = vmatprep.subr.mxu0 0.0
    %128 = vmatpush1.msra.mxu0 0.0
    %129 = vmatprep.subr.mxu0 0.0
    %130 = vmatpush1.msra.mxu0 0.0
    %131 = vmatprep.subr.mxu0 0.0
    %132 = vmatpush1.msra.mxu0 0.0
    %133 = vmatprep.subr.mxu0 0.0
    %134 = vmatpush1.msra.mxu0 0.0
    %135 = vmatprep.subr.mxu0 0.0
    %136 = vmatpush1.msra.mxu0 0.0
    %137 = vmatprep.subr.mxu0 0.0
    %138 = vmatpush1.msra.mxu0 0.0
    %139 = vmatprep.mubr.f32.mxu0 0.0
    %140 = vmatmul.mubr.f32.gmra.mrb[0].mxu0 %v70
    %v141 = vpop.f32.mrb[0].mxu0
    %v142 = vadd.f32 0.0, %v141
    %v143 = vpop.f32.mrb[0].mxu0
    %144 = vmatprep.mubr.f32.mxu0 0.0
    %145 = vmatmul.mubr.f32.gmra.mrb[0].mxu0 %v73
    %v146 = vpop.f32.mrb[0].mxu0
    %v147 = vadd.f32 0.0, %v146
    %v148 = vpop.f32.mrb[0].mxu0
    %149 = vdwg.mxu0
    %152 = vrot.lane.b32.xlu0 %v142, 120
    %v153 = vpop.permute.xlu0 %152
    %154 = vrot.lane.b32.xlu0 %v147, 120
    %v155 = vpop.permute.xlu0 %154
    %156 = vrot.lane.b32.xlu0 %v142, 112
    %v157 = vpop.permute.xlu0 %156
    %158 = vrot.lane.b32.xlu0 %v147, 112
    %v159 = vpop.permute.xlu0 %158
    %160 = vrot.lane.b32.xlu0 %v142, 104
    %v161 = vpop.permute.xlu0 %160
    %162 = vrot.lane.b32.xlu0 %v147, 104
    %v163 = vpop.permute.xlu0 %162
    %164 = vrot.lane.b32.xlu0 %v142, 96
    %v165 = vpop.permute.xlu0 %164
    %vm166 = vcmask 64512
    %v167 = vsel %vm166, %v142, 0
    %v169 = vsel %vm166, %v165, 0
    %171 = vmatprep.subr.mxu0 0.0
    %172 = vmatpush1.xpose.msra.mxu0 %v169
    %173 = vmatprep.subr.mxu0 0.0
    %174 = vmatpush1.xpose.msra.mxu0 0.0
    %175 = vmatprep.subr.mxu0 0.0
    %176 = vmatpush1.xpose.msra.mxu0 0.0
    %177 = vmatprep.subr.mxu0 0.0
    %178 = vmatpush1.xpose.msra.mxu0 0.0
    %179 = vmatprep.subr.mxu0 0.0
    %180 = vmatpush1.xpose.msra.mxu0 0.0
    %181 = vmatprep.subr.mxu0 0.0
    %182 = vmatpush1.xpose.msra.mxu0 0.0
    %183 = vmatprep.subr.mxu0 0.0
    %184 = vmatpush1.xpose.msra.mxu0 0.0
    %185 = vmatprep.subr.mxu0 0.0
    %186 = vmatpush1.xpose.msra.mxu0 0.0
    %187 = vmatprep.subr.mxu0 0.0
    %188 = vmatpush1.xpose.msra.mxu0 0.0
    %189 = vmatprep.subr.mxu0 0.0
    %190 = vmatpush1.xpose.msra.mxu0 0.0
    %191 = vmatprep.subr.mxu0 0.0
    %192 = vmatpush1.xpose.msra.mxu0 0.0
    %193 = vmatprep.subr.mxu0 0.0
    %194 = vmatpush1.xpose.msra.mxu0 0.0
    %195 = vmatprep.subr.mxu0 0.0
    %196 = vmatpush1.xpose.msra.mxu0 0.0
    %197 = vmatprep.subr.mxu0 0.0
    %198 = vmatpush1.xpose.msra.mxu0 0.0
    %199 = vmatprep.subr.mxu0 0.0
    %200 = vmatpush1.xpose.msra.mxu0 0.0
    %201 = vmatprep.subr.mxu0 0.0
    %202 = vmatpush1.xpose.msra.mxu0 0.0
    %203 = vmatprep.subr.mxu0 0.0
    %204 = vmatpush1.xpose.msra.mxu0 0.0
    %205 = vmatprep.subr.mxu0 0.0
    %206 = vmatpush1.xpose.msra.mxu0 0.0
    %207 = vmatprep.subr.mxu0 0.0
    %208 = vmatpush1.xpose.msra.mxu0 0.0
    %209 = vmatprep.subr.mxu0 0.0
    %210 = vmatpush1.xpose.msra.mxu0 0.0
    %211 = vmatprep.subr.mxu0 0.0
    %212 = vmatpush1.xpose.msra.mxu0 0.0
    %213 = vmatprep.subr.mxu0 0.0
    %214 = vmatpush1.xpose.msra.mxu0 0.0
    %215 = vmatprep.subr.mxu0 0.0
    %216 = vmatpush1.xpose.msra.mxu0 0.0
    %217 = vmatprep.subr.mxu0 0.0
    %218 = vmatpush1.xpose.msra.mxu0 0.0
    %219 = vmatprep.subr.mxu0 0.0
    %220 = vmatpush1.xpose.msra.mxu0 0.0
    %221 = vmatprep.subr.mxu0 0.0
    %222 = vmatpush1.xpose.msra.mxu0 0.0
    %223 = vmatprep.subr.mxu0 0.0
    %224 = vmatpush1.xpose.msra.mxu0 0.0
    %225 = vmatprep.subr.mxu0 0.0
    %226 = vmatpush1.xpose.msra.mxu0 0.0
    %227 = vmatprep.subr.mxu0 0.0
    %228 = vmatpush1.xpose.msra.mxu0 0.0
    %229 = vmatprep.subr.mxu0 0.0
    %230 = vmatpush1.xpose.msra.mxu0 0.0
    %231 = vmatprep.subr.mxu0 0.0
    %232 = vmatpush1.xpose.msra.mxu0 0.0
    %233 = vmatprep.subr.mxu0 0.0
    %234 = vmatpush1.xpose.msra.mxu0 0.0
    %235 = vmatprep.mubr.f32.mxu0 0.0
    %236 = vmatmul.mubr.f32.gmra.mrb[0].mxu0 %v167
    %v237 = vpop.f32.mrb[0].mxu0
    %v238 = vadd.f32 0.0, %v237
    %v239 = vpop.f32.mrb[0].mxu0
    %240 = vdwg.mxu0
    %241 = vrot.lane.b32.xlu0 %v147, 96
    %v242 = vpop.permute.xlu0 %241
    %v243 = vsel %vm166, %v147, 0
    %v245 = vsel %vm166, %v242, 0
    %247 = vmatprep.subr.mxu0 0.0
    %248 = vmatpush1.xpose.msra.mxu0 %v245
    %249 = vmatprep.subr.mxu0 0.0
    %250 = vmatpush1.xpose.msra.mxu0 0.0
    %251 = vmatprep.subr.mxu0 0.0
    %252 = vmatpush1.xpose.msra.mxu0 0.0
    %253 = vmatprep.subr.mxu0 0.0
    %254 = vmatpush1.xpose.msra.mxu0 0.0
    %255 = vmatprep.subr.mxu0 0.0
    %256 = vmatpush1.xpose.msra.mxu0 0.0
    %257 = vmatprep.subr.mxu0 0.0
    %258 = vmatpush1.xpose.msra.mxu0 0.0
    %259 = vmatprep.subr.mxu0 0.0
    %260 = vmatpush1.xpose.msra.mxu0 0.0
    %261 = vmatprep.subr.mxu0 0.0
    %262 = vmatpush1.xpose.msra.mxu0 0.0
    %263 = vmatprep.subr.mxu0 0.0
    %264 = vmatpush1.xpose.msra.mxu0 0.0
    %265 = vmatprep.subr.mxu0 0.0
    %266 = vmatpush1.xpose.msra.mxu0 0.0
    %267 = vmatprep.subr.mxu0 0.0
    %268 = vmatpush1.xpose.msra.mxu0 0.0
    %269 = vmatprep.subr.mxu0 0.0
    %270 = vmatpush1.xpose.msra.mxu0 0.0
    %271 = vmatprep.subr.mxu0 0.0
    %272 = vmatpush1.xpose.msra.mxu0 0.0
    %273 = vmatprep.subr.mxu0 0.0
    %274 = vmatpush1.xpose.msra.mxu0 0.0
    %275 = vmatprep.subr.mxu0 0.0
    %276 = vmatpush1.xpose.msra.mxu0 0.0
    %277 = vmatprep.subr.mxu0 0.0
    %278 = vmatpush1.xpose.msra.mxu0 0.0
    %279 = vmatprep.subr.mxu0 0.0
    %280 = vmatpush1.xpose.msra.mxu0 0.0
    %281 = vmatprep.subr.mxu0 0.0
    %282 = vmatpush1.xpose.msra.mxu0 0.0
    %283 = vmatprep.subr.mxu0 0.0
    %284 = vmatpush1.xpose.msra.mxu0 0.0
    %285 = vmatprep.subr.mxu0 0.0
    %286 = vmatpush1.xpose.msra.mxu0 0.0
    %287 = vmatprep.subr.mxu0 0.0
    %288 = vmatpush1.xpose.msra.mxu0 0.0
    %289 = vmatprep.subr.mxu0 0.0
    %290 = vmatpush1.xpose.msra.mxu0 0.0
    %291 = vmatprep.subr.mxu0 0.0
    %292 = vmatpush1.xpose.msra.mxu0 0.0
    %293 = vmatprep.subr.mxu0 0.0
    %294 = vmatpush1.xpose.msra.mxu0 0.0
    %295 = vmatprep.subr.mxu0 0.0
    %296 = vmatpush1.xpose.msra.mxu0 0.0
    %297 = vmatprep.subr.mxu0 0.0
    %298 = vmatpush1.xpose.msra.mxu0 0.0
    %299 = vmatprep.subr.mxu0 0.0
    %300 = vmatpush1.xpose.msra.mxu0 0.0
    %301 = vmatprep.subr.mxu0 0.0
    %302 = vmatpush1.xpose.msra.mxu0 0.0
    %303 = vmatprep.subr.mxu0 0.0
    %304 = vmatpush1.xpose.msra.mxu0 0.0
    %305 = vmatprep.subr.mxu0 0.0
    %306 = vmatpush1.xpose.msra.mxu0 0.0
    %307 = vmatprep.subr.mxu0 0.0
    %308 = vmatpush1.xpose.msra.mxu0 0.0
    %309 = vmatprep.subr.mxu0 0.0
    %310 = vmatpush1.xpose.msra.mxu0 0.0
    %311 = vmatprep.mubr.f32.mxu0 0.0
    %312 = vmatmul.mubr.f32.gmra.mrb[0].mxu0 %v243
    %v313 = vpop.f32.mrb[0].mxu0
    %v314 = vadd.f32 0.0, %v313
    %v315 = vpop.f32.mrb[0].mxu0
    %316 = vdwg.mxu0
    %317 = vrot.lane.b32.xlu0 %v153, 96
    %v318 = vpop.permute.xlu0 %317
    %v319 = vsel %vm166, %v153, 0
    %v321 = vsel %vm166, %v318, 0
    %323 = vmatprep.subr.mxu0 0.0
    %324 = vmatpush1.xpose.msra.mxu0 %v321
    %325 = vmatprep.subr.mxu0 0.0
    %326 = vmatpush1.xpose.msra.mxu0 0.0
    %327 = vmatprep.subr.mxu0 0.0
    %328 = vmatpush1.xpose.msra.mxu0 0.0
    %329 = vmatprep.subr.mxu0 0.0
    %330 = vmatpush1.xpose.msra.mxu0 0.0
    %331 = vmatprep.subr.mxu0 0.0
    %332 = vmatpush1.xpose.msra.mxu0 0.0
    %333 = vmatprep.subr.mxu0 0.0
    %334 = vmatpush1.xpose.msra.mxu0 0.0
    %335 = vmatprep.subr.mxu0 0.0
    %336 = vmatpush1.xpose.msra.mxu0 0.0
    %337 = vmatprep.subr.mxu0 0.0
    %338 = vmatpush1.xpose.msra.mxu0 0.0
    %339 = vmatprep.subr.mxu0 0.0
    %340 = vmatpush1.xpose.msra.mxu0 0.0
    %341 = vmatprep.subr.mxu0 0.0
    %342 = vmatpush1.xpose.msra.mxu0 0.0
    %343 = vmatprep.subr.mxu0 0.0
    %344 = vmatpush1.xpose.msra.mxu0 0.0
    %345 = vmatprep.subr.mxu0 0.0
    %346 = vmatpush1.xpose.msra.mxu0 0.0
    %347 = vmatprep.subr.mxu0 0.0
    %348 = vmatpush1.xpose.msra.mxu0 0.0
    %349 = vmatprep.subr.mxu0 0.0
    %350 = vmatpush1.xpose.msra.mxu0 0.0
    %351 = vmatprep.subr.mxu0 0.0
    %352 = vmatpush1.xpose.msra.mxu0 0.0
    %353 = vmatprep.subr.mxu0 0.0
    %354 = vmatpush1.xpose.msra.mxu0 0.0
    %355 = vmatprep.subr.mxu0 0.0
    %356 = vmatpush1.xpose.msra.mxu0 0.0
    %357 = vmatprep.subr.mxu0 0.0
    %358 = vmatpush1.xpose.msra.mxu0 0.0
    %359 = vmatprep.subr.mxu0 0.0
    %360 = vmatpush1.xpose.msra.mxu0 0.0
    %361 = vmatprep.subr.mxu0 0.0
    %362 = vmatpush1.xpose.msra.mxu0 0.0
    %363 = vmatprep.subr.mxu0 0.0
    %364 = vmatpush1.xpose.msra.mxu0 0.0
    %365 = vmatprep.subr.mxu0 0.0
    %366 = vmatpush1.xpose.msra.mxu0 0.0
    %367 = vmatprep.subr.mxu0 0.0
    %368 = vmatpush1.xpose.msra.mxu0 0.0
    %369 = vmatprep.subr.mxu0 0.0
    %370 = vmatpush1.xpose.msra.mxu0 0.0
    %371 = vmatprep.subr.mxu0 0.0
    %372 = vmatpush1.xpose.msra.mxu0 0.0
    %373 = vmatprep.subr.mxu0 0.0
    %374 = vmatpush1.xpose.msra.mxu0 0.0
    %375 = vmatprep.subr.mxu0 0.0
    %376 = vmatpush1.xpose.msra.mxu0 0.0
    %377 = vmatprep.subr.mxu0 0.0
    %378 = vmatpush1.xpose.msra.mxu0 0.0
    %379 = vmatprep.subr.mxu0 0.0
    %380 = vmatpush1.xpose.msra.mxu0 0.0
    %381 = vmatprep.subr.mxu0 0.0
    %382 = vmatpush1.xpose.msra.mxu0 0.0
    %383 = vmatprep.subr.mxu0 0.0
    %384 = vmatpush1.xpose.msra.mxu0 0.0
    %385 = vmatprep.subr.mxu0 0.0
    %386 = vmatpush1.xpose.msra.mxu0 0.0
    %387 = vmatprep.mubr.f32.mxu0 0.0
    %388 = vmatmul.mubr.f32.gmra.mrb[0].mxu0 %v319
    %v389 = vpop.f32.mrb[0].mxu0
    %v390 = vadd.f32 0.0, %v389
    %v391 = vpop.f32.mrb[0].mxu0
    %392 = vdwg.mxu0
    %393 = vrot.lane.b32.xlu0 %v155, 96
    %v394 = vpop.permute.xlu0 %393
    %v395 = vsel %vm166, %v155, 0
    %v397 = vsel %vm166, %v394, 0
    %399 = vmatprep.subr.mxu0 0.0
    %400 = vmatpush1.xpose.msra.mxu0 %v397
    %401 = vmatprep.subr.mxu0 0.0
    %402 = vmatpush1.xpose.msra.mxu0 0.0
    %403 = vmatprep.subr.mxu0 0.0
    %404 = vmatpush1.xpose.msra.mxu0 0.0
    %405 = vmatprep.subr.mxu0 0.0
    %406 = vmatpush1.xpose.msra.mxu0 0.0
    %407 = vmatprep.subr.mxu0 0.0
    %408 = vmatpush1.xpose.msra.mxu0 0.0
    %409 = vmatprep.subr.mxu0 0.0
    %410 = vmatpush1.xpose.msra.mxu0 0.0
    %411 = vmatprep.subr.mxu0 0.0
    %412 = vmatpush1.xpose.msra.mxu0 0.0
    %413 = vmatprep.subr.mxu0 0.0
    %414 = vmatpush1.xpose.msra.mxu0 0.0
    %415 = vmatprep.subr.mxu0 0.0
    %416 = vmatpush1.xpose.msra.mxu0 0.0
    %417 = vmatprep.subr.mxu0 0.0
    %418 = vmatpush1.xpose.msra.mxu0 0.0
    %419 = vmatprep.subr.mxu0 0.0
    %420 = vmatpush1.xpose.msra.mxu0 0.0
    %421 = vmatprep.subr.mxu0 0.0
    %422 = vmatpush1.xpose.msra.mxu0 0.0
    %423 = vmatprep.subr.mxu0 0.0
    %424 = vmatpush1.xpose.msra.mxu0 0.0
    %425 = vmatprep.subr.mxu0 0.0
    %426 = vmatpush1.xpose.msra.mxu0 0.0
    %427 = vmatprep.subr.mxu0 0.0
    %428 = vmatpush1.xpose.msra.mxu0 0.0
    %429 = vmatprep.subr.mxu0 0.0
    %430 = vmatpush1.xpose.msra.mxu0 0.0
    %431 = vmatprep.subr.mxu0 0.0
    %432 = vmatpush1.xpose.msra.mxu0 0.0
    %433 = vmatprep.subr.mxu0 0.0
    %434 = vmatpush1.xpose.msra.mxu0 0.0
    %435 = vmatprep.subr.mxu0 0.0
    %436 = vmatpush1.xpose.msra.mxu0 0.0
    %437 = vmatprep.subr.mxu0 0.0
    %438 = vmatpush1.xpose.msra.mxu0 0.0
    %439 = vmatprep.subr.mxu0 0.0
    %440 = vmatpush1.xpose.msra.mxu0 0.0
    %441 = vmatprep.subr.mxu0 0.0
    %442 = vmatpush1.xpose.msra.mxu0 0.0
    %443 = vmatprep.subr.mxu0 0.0
    %444 = vmatpush1.xpose.msra.mxu0 0.0
    %445 = vmatprep.subr.mxu0 0.0
    %446 = vmatpush1.xpose.msra.mxu0 0.0
    %447 = vmatprep.subr.mxu0 0.0
    %448 = vmatpush1.xpose.msra.mxu0 0.0
    %449 = vmatprep.subr.mxu0 0.0
    %450 = vmatpush1.xpose.msra.mxu0 0.0
    %451 = vmatprep.subr.mxu0 0.0
    %452 = vmatpush1.xpose.msra.mxu0 0.0
    %453 = vmatprep.subr.mxu0 0.0
    %454 = vmatpush1.xpose.msra.mxu0 0.0
    %455 = vmatprep.subr.mxu0 0.0
    %456 = vmatpush1.xpose.msra.mxu0 0.0
    %457 = vmatprep.subr.mxu0 0.0
    %458 = vmatpush1.xpose.msra.mxu0 0.0
    %459 = vmatprep.subr.mxu0 0.0
    %460 = vmatpush1.xpose.msra.mxu0 0.0
    %461 = vmatprep.subr.mxu0 0.0
    %462 = vmatpush1.xpose.msra.mxu0 0.0
    %463 = vmatprep.mubr.f32.mxu0 0.0
    %464 = vmatmul.mubr.f32.gmra.mrb[0].mxu0 %v395
    %v465 = vpop.f32.mrb[0].mxu0
    %v466 = vadd.f32 0.0, %v465
    %v467 = vpop.f32.mrb[0].mxu0
    %468 = vdwg.mxu0
    %469 = vrot.lane.b32.xlu0 %v157, 96
    %v470 = vpop.permute.xlu0 %469
    %v471 = vsel %vm166, %v157, 0
    %v473 = vsel %vm166, %v470, 0
    %475 = vmatprep.subr.mxu0 0.0
    %476 = vmatpush1.xpose.msra.mxu0 %v473
    %477 = vmatprep.subr.mxu0 0.0
    %478 = vmatpush1.xpose.msra.mxu0 0.0
    %479 = vmatprep.subr.mxu0 0.0
    %480 = vmatpush1.xpose.msra.mxu0 0.0
    %481 = vmatprep.subr.mxu0 0.0
    %482 = vmatpush1.xpose.msra.mxu0 0.0
    %483 = vmatprep.subr.mxu0 0.0
    %484 = vmatpush1.xpose.msra.mxu0 0.0
    %485 = vmatprep.subr.mxu0 0.0
    %486 = vmatpush1.xpose.msra.mxu0 0.0
    %487 = vmatprep.subr.mxu0 0.0
    %488 = vmatpush1.xpose.msra.mxu0 0.0
    %489 = vmatprep.subr.mxu0 0.0
    %490 = vmatpush1.xpose.msra.mxu0 0.0
    %491 = vmatprep.subr.mxu0 0.0
    %492 = vmatpush1.xpose.msra.mxu0 0.0
    %493 = vmatprep.subr.mxu0 0.0
    %494 = vmatpush1.xpose.msra.mxu0 0.0
    %495 = vmatprep.subr.mxu0 0.0
    %496 = vmatpush1.xpose.msra.mxu0 0.0
    %497 = vmatprep.subr.mxu0 0.0
    %498 = vmatpush1.xpose.msra.mxu0 0.0
    %499 = vmatprep.subr.mxu0 0.0
    %500 = vmatpush1.xpose.msra.mxu0 0.0
    %501 = vmatprep.subr.mxu0 0.0
    %502 = vmatpush1.xpose.msra.mxu0 0.0
    %503 = vmatprep.subr.mxu0 0.0
    %504 = vmatpush1.xpose.msra.mxu0 0.0
    %505 = vmatprep.subr.mxu0 0.0
    %506 = vmatpush1.xpose.msra.mxu0 0.0
    %507 = vmatprep.subr.mxu0 0.0
    %508 = vmatpush1.xpose.msra.mxu0 0.0
    %509 = vmatprep.subr.mxu0 0.0
    %510 = vmatpush1.xpose.msra.mxu0 0.0
    %511 = vmatprep.subr.mxu0 0.0
    %512 = vmatpush1.xpose.msra.mxu0 0.0
    %513 = vmatprep.subr.mxu0 0.0
    %514 = vmatpush1.xpose.msra.mxu0 0.0
    %515 = vmatprep.subr.mxu0 0.0
    %516 = vmatpush1.xpose.msra.mxu0 0.0
    %517 = vmatprep.subr.mxu0 0.0
    %518 = vmatpush1.xpose.msra.mxu0 0.0
    %519 = vmatprep.subr.mxu0 0.0
    %520 = vmatpush1.xpose.msra.mxu0 0.0
    %521 = vmatprep.subr.mxu0 0.0
    %522 = vmatpush1.xpose.msra.mxu0 0.0
    %523 = vmatprep.subr.mxu0 0.0
    %524 = vmatpush1.xpose.msra.mxu0 0.0
    %525 = vmatprep.subr.mxu0 0.0
    %526 = vmatpush1.xpose.msra.mxu0 0.0
    %527 = vmatprep.subr.mxu0 0.0
    %528 = vmatpush1.xpose.msra.mxu0 0.0
    %529 = vmatprep.subr.mxu0 0.0
    %530 = vmatpush1.xpose.msra.mxu0 0.0
    %531 = vmatprep.subr.mxu0 0.0
    %532 = vmatpush1.xpose.msra.mxu0 0.0
    %533 = vmatprep.subr.mxu0 0.0
    %534 = vmatpush1.xpose.msra.mxu0 0.0
    %535 = vmatprep.subr.mxu0 0.0
    %536 = vmatpush1.xpose.msra.mxu0 0.0
    %537 = vmatprep.subr.mxu0 0.0
    %538 = vmatpush1.xpose.msra.mxu0 0.0
    %539 = vmatprep.mubr.f32.mxu0 0.0
    %540 = vmatmul.mubr.f32.gmra.mrb[0].mxu0 %v471
    %v541 = vpop.f32.mrb[0].mxu0
    %v542 = vadd.f32 0.0, %v541
    %v543 = vpop.f32.mrb[0].mxu0
    %544 = vdwg.mxu0
    %545 = vrot.lane.b32.xlu0 %v159, 96
    %v546 = vpop.permute.xlu0 %545
    %v547 = vsel %vm166, %v159, 0
    %v549 = vsel %vm166, %v546, 0
    %551 = vmatprep.subr.mxu0 0.0
    %552 = vmatpush1.xpose.msra.mxu0 %v549
    %553 = vmatprep.subr.mxu0 0.0
    %554 = vmatpush1.xpose.msra.mxu0 0.0
    %555 = vmatprep.subr.mxu0 0.0
    %556 = vmatpush1.xpose.msra.mxu0 0.0
    %557 = vmatprep.subr.mxu0 0.0
    %558 = vmatpush1.xpose.msra.mxu0 0.0
    %559 = vmatprep.subr.mxu0 0.0
    %560 = vmatpush1.xpose.msra.mxu0 0.0
    %561 = vmatprep.subr.mxu0 0.0
    %562 = vmatpush1.xpose.msra.mxu0 0.0
    %563 = vmatprep.subr.mxu0 0.0
    %564 = vmatpush1.xpose.msra.mxu0 0.0
    %565 = vmatprep.subr.mxu0 0.0
    %566 = vmatpush1.xpose.msra.mxu0 0.0
    %567 = vmatprep.subr.mxu0 0.0
    %568 = vmatpush1.xpose.msra.mxu0 0.0
    %569 = vmatprep.subr.mxu0 0.0
    %570 = vmatpush1.xpose.msra.mxu0 0.0
    %571 = vmatprep.subr.mxu0 0.0
    %572 = vmatpush1.xpose.msra.mxu0 0.0
    %573 = vmatprep.subr.mxu0 0.0
    %574 = vmatpush1.xpose.msra.mxu0 0.0
    %575 = vmatprep.subr.mxu0 0.0
    %576 = vmatpush1.xpose.msra.mxu0 0.0
    %577 = vmatprep.subr.mxu0 0.0
    %578 = vmatpush1.xpose.msra.mxu0 0.0
    %579 = vmatprep.subr.mxu0 0.0
    %580 = vmatpush1.xpose.msra.mxu0 0.0
    %581 = vmatprep.subr.mxu0 0.0
    %582 = vmatpush1.xpose.msra.mxu0 0.0
    %583 = vmatprep.subr.mxu0 0.0
    %584 = vmatpush1.xpose.msra.mxu0 0.0
    %585 = vmatprep.subr.mxu0 0.0
    %586 = vmatpush1.xpose.msra.mxu0 0.0
    %587 = vmatprep.subr.mxu0 0.0
    %588 = vmatpush1.xpose.msra.mxu0 0.0
    %589 = vmatprep.subr.mxu0 0.0
    %590 = vmatpush1.xpose.msra.mxu0 0.0
    %591 = vmatprep.subr.mxu0 0.0
    %592 = vmatpush1.xpose.msra.mxu0 0.0
    %593 = vmatprep.subr.mxu0 0.0
    %594 = vmatpush1.xpose.msra.mxu0 0.0
    %595 = vmatprep.subr.mxu0 0.0
    %596 = vmatpush1.xpose.msra.mxu0 0.0
    %597 = vmatprep.subr.mxu0 0.0
    %598 = vmatpush1.xpose.msra.mxu0 0.0
    %599 = vmatprep.subr.mxu0 0.0
    %600 = vmatpush1.xpose.msra.mxu0 0.0
    %601 = vmatprep.subr.mxu0 0.0
    %602 = vmatpush1.xpose.msra.mxu0 0.0
    %603 = vmatprep.subr.mxu0 0.0
    %604 = vmatpush1.xpose.msra.mxu0 0.0
    %605 = vmatprep.subr.mxu0 0.0
    %606 = vmatpush1.xpose.msra.mxu0 0.0
    %607 = vmatprep.subr.mxu0 0.0
    %608 = vmatpush1.xpose.msra.mxu0 0.0
    %609 = vmatprep.subr.mxu0 0.0
    %610 = vmatpush1.xpose.msra.mxu0 0.0
    %611 = vmatprep.subr.mxu0 0.0
    %612 = vmatpush1.xpose.msra.mxu0 0.0
    %613 = vmatprep.subr.mxu0 0.0
    %614 = vmatpush1.xpose.msra.mxu0 0.0
    %615 = vmatprep.mubr.f32.mxu0 0.0
    %616 = vmatmul.mubr.f32.gmra.mrb[0].mxu0 %v547
    %v617 = vpop.f32.mrb[0].mxu0
    %v618 = vadd.f32 0.0, %v617
    %v619 = vpop.f32.mrb[0].mxu0
    %620 = vdwg.mxu0
    %621 = vrot.lane.b32.xlu0 %v161, 96
    %v622 = vpop.permute.xlu0 %621
    %v623 = vsel %vm166, %v161, 0
    %v625 = vsel %vm166, %v622, 0
    %627 = vmatprep.subr.mxu0 0.0
    %628 = vmatpush1.xpose.msra.mxu0 %v625
    %629 = vmatprep.subr.mxu0 0.0
    %630 = vmatpush1.xpose.msra.mxu0 0.0
    %631 = vmatprep.subr.mxu0 0.0
    %632 = vmatpush1.xpose.msra.mxu0 0.0
    %633 = vmatprep.subr.mxu0 0.0
    %634 = vmatpush1.xpose.msra.mxu0 0.0
    %635 = vmatprep.subr.mxu0 0.0
    %636 = vmatpush1.xpose.msra.mxu0 0.0
    %637 = vmatprep.subr.mxu0 0.0
    %638 = vmatpush1.xpose.msra.mxu0 0.0
    %639 = vmatprep.subr.mxu0 0.0
    %640 = vmatpush1.xpose.msra.mxu0 0.0
    %641 = vmatprep.subr.mxu0 0.0
    %642 = vmatpush1.xpose.msra.mxu0 0.0
    %643 = vmatprep.subr.mxu0 0.0
    %644 = vmatpush1.xpose.msra.mxu0 0.0
    %645 = vmatprep.subr.mxu0 0.0
    %646 = vmatpush1.xpose.msra.mxu0 0.0
    %647 = vmatprep.subr.mxu0 0.0
    %648 = vmatpush1.xpose.msra.mxu0 0.0
    %649 = vmatprep.subr.mxu0 0.0
    %650 = vmatpush1.xpose.msra.mxu0 0.0
    %651 = vmatprep.subr.mxu0 0.0
    %652 = vmatpush1.xpose.msra.mxu0 0.0
    %653 = vmatprep.subr.mxu0 0.0
    %654 = vmatpush1.xpose.msra.mxu0 0.0
    %655 = vmatprep.subr.mxu0 0.0
    %656 = vmatpush1.xpose.msra.mxu0 0.0
    %657 = vmatprep.subr.mxu0 0.0
    %658 = vmatpush1.xpose.msra.mxu0 0.0
    %659 = vmatprep.subr.mxu0 0.0
    %660 = vmatpush1.xpose.msra.mxu0 0.0
    %661 = vmatprep.subr.mxu0 0.0
    %662 = vmatpush1.xpose.msra.mxu0 0.0
    %663 = vmatprep.subr.mxu0 0.0
    %664 = vmatpush1.xpose.msra.mxu0 0.0
    %665 = vmatprep.subr.mxu0 0.0
    %666 = vmatpush1.xpose.msra.mxu0 0.0
    %667 = vmatprep.subr.mxu0 0.0
    %668 = vmatpush1.xpose.msra.mxu0 0.0
    %669 = vmatprep.subr.mxu0 0.0
    %670 = vmatpush1.xpose.msra.mxu0 0.0
    %671 = vmatprep.subr.mxu0 0.0
    %672 = vmatpush1.xpose.msra.mxu0 0.0
    %673 = vmatprep.subr.mxu0 0.0
    %674 = vmatpush1.xpose.msra.mxu0 0.0
    %675 = vmatprep.subr.mxu0 0.0
    %676 = vmatpush1.xpose.msra.mxu0 0.0
    %677 = vmatprep.subr.mxu0 0.0
    %678 = vmatpush1.xpose.msra.mxu0 0.0
    %679 = vmatprep.subr.mxu0 0.0
    %680 = vmatpush1.xpose.msra.mxu0 0.0
    %681 = vmatprep.subr.mxu0 0.0
    %682 = vmatpush1.xpose.msra.mxu0 0.0
    %683 = vmatprep.subr.mxu0 0.0
    %684 = vmatpush1.xpose.msra.mxu0 0.0
    %685 = vmatprep.subr.mxu0 0.0
    %686 = vmatpush1.xpose.msra.mxu0 0.0
    %687 = vmatprep.subr.mxu0 0.0
    %688 = vmatpush1.xpose.msra.mxu0 0.0
    %689 = vmatprep.subr.mxu0 0.0
    %690 = vmatpush1.xpose.msra.mxu0 0.0
    %691 = vmatprep.mubr.f32.mxu0 0.0
    %692 = vmatmul.mubr.f32.gmra.mrb[0].mxu0 %v623
    %v693 = vpop.f32.mrb[0].mxu0
    %v694 = vadd.f32 0.0, %v693
    %v695 = vpop.f32.mrb[0].mxu0
    %696 = vdwg.mxu0
    %697 = vrot.lane.b32.xlu0 %v163, 96
    %v698 = vpop.permute.xlu0 %697
    %v699 = vsel %vm166, %v163, 0
    %v701 = vsel %vm166, %v698, 0
    %703 = vmatprep.subr.mxu0 0.0
    %704 = vmatpush1.xpose.msra.mxu0 %v701
    %705 = vmatprep.subr.mxu0 0.0
    %706 = vmatpush1.xpose.msra.mxu0 0.0
    %707 = vmatprep.subr.mxu0 0.0
    %708 = vmatpush1.xpose.msra.mxu0 0.0
    %709 = vmatprep.subr.mxu0 0.0
    %710 = vmatpush1.xpose.msra.mxu0 0.0
    %711 = vmatprep.subr.mxu0 0.0
    %712 = vmatpush1.xpose.msra.mxu0 0.0
    %713 = vmatprep.subr.mxu0 0.0
    %714 = vmatpush1.xpose.msra.mxu0 0.0
    %715 = vmatprep.subr.mxu0 0.0
    %716 = vmatpush1.xpose.msra.mxu0 0.0
    %717 = vmatprep.subr.mxu0 0.0
    %718 = vmatpush1.xpose.msra.mxu0 0.0
    %719 = vmatprep.subr.mxu0 0.0
    %720 = vmatpush1.xpose.msra.mxu0 0.0
    %721 = vmatprep.subr.mxu0 0.0
    %722 = vmatpush1.xpose.msra.mxu0 0.0
    %723 = vmatprep.subr.mxu0 0.0
    %724 = vmatpush1.xpose.msra.mxu0 0.0
    %725 = vmatprep.subr.mxu0 0.0
    %726 = vmatpush1.xpose.msra.mxu0 0.0
    %727 = vmatprep.subr.mxu0 0.0
    %728 = vmatpush1.xpose.msra.mxu0 0.0
    %729 = vmatprep.subr.mxu0 0.0
    %730 = vmatpush1.xpose.msra.mxu0 0.0
    %731 = vmatprep.subr.mxu0 0.0
    %732 = vmatpush1.xpose.msra.mxu0 0.0
    %733 = vmatprep.subr.mxu0 0.0
    %734 = vmatpush1.xpose.msra.mxu0 0.0
    %735 = vmatprep.subr.mxu0 0.0
    %736 = vmatpush1.xpose.msra.mxu0 0.0
    %737 = vmatprep.subr.mxu0 0.0
    %738 = vmatpush1.xpose.msra.mxu0 0.0
    %739 = vmatprep.subr.mxu0 0.0
    %740 = vmatpush1.xpose.msra.mxu0 0.0
    %741 = vmatprep.subr.mxu0 0.0
    %742 = vmatpush1.xpose.msra.mxu0 0.0
    %743 = vmatprep.subr.mxu0 0.0
    %744 = vmatpush1.xpose.msra.mxu0 0.0
    %745 = vmatprep.subr.mxu0 0.0
    %746 = vmatpush1.xpose.msra.mxu0 0.0
    %747 = vmatprep.subr.mxu0 0.0
    %748 = vmatpush1.xpose.msra.mxu0 0.0
    %749 = vmatprep.subr.mxu0 0.0
    %750 = vmatpush1.xpose.msra.mxu0 0.0
    %751 = vmatprep.subr.mxu0 0.0
    %752 = vmatpush1.xpose.msra.mxu0 0.0
    %753 = vmatprep.subr.mxu0 0.0
    %754 = vmatpush1.xpose.msra.mxu0 0.0
    %755 = vmatprep.subr.mxu0 0.0
    %756 = vmatpush1.xpose.msra.mxu0 0.0
    %757 = vmatprep.subr.mxu0 0.0
    %758 = vmatpush1.xpose.msra.mxu0 0.0
    %759 = vmatprep.subr.mxu0 0.0
    %760 = vmatpush1.xpose.msra.mxu0 0.0
    %761 = vmatprep.subr.mxu0 0.0
    %762 = vmatpush1.xpose.msra.mxu0 0.0
    %763 = vmatprep.subr.mxu0 0.0
    %764 = vmatpush1.xpose.msra.mxu0 0.0
    %765 = vmatprep.subr.mxu0 0.0
    %766 = vmatpush1.xpose.msra.mxu0 0.0
    %767 = vmatprep.mubr.f32.mxu0 0.0
    %768 = vmatmul.mubr.f32.gmra.mrb[0].mxu0 %v699
    %v769 = vpop.f32.mrb[0].mxu0
    %v770 = vadd.f32 0.0, %v769
    %v771 = vpop.f32.mrb[0].mxu0
    %772 = vdwg.mxu0
    %v773 = vsel %vm166, %v238, -inf
    %774 = vmax.xlane.f32.xlu0 %v773
    %v775 = vpop.xlane.xlu0 %774
    %v776 = vsel %vm166, %v314, -inf
    %777 = vmax.xlane.f32.xlu0 %v776
    %v778 = vpop.xlane.xlu0 %777
    %v779 = vsel %vm166, %v390, -inf
    %780 = vmax.xlane.f32.xlu0 %v779
    %v781 = vpop.xlane.xlu0 %780
    %v782 = vsel %vm166, %v466, -inf
    %783 = vmax.xlane.f32.xlu0 %v782
    %v784 = vpop.xlane.xlu0 %783
    %v785 = vsel %vm166, %v542, -inf
    %786 = vmax.xlane.f32.xlu0 %v785
    %v787 = vpop.xlane.xlu0 %786
    %v788 = vsel %vm166, %v618, -inf
    %789 = vmax.xlane.f32.xlu0 %v788
    %v790 = vpop.xlane.xlu0 %789
    %v791 = vsel %vm166, %v694, -inf
    %792 = vmax.xlane.f32.xlu0 %v791
    %v793 = vpop.xlane.xlu0 %792
    %v794 = vsel %vm166, %v770, -inf
    %795 = vmax.xlane.f32.xlu0 %v794
    %v796 = vpop.xlane.xlu0 %795
    %v797 = vsub.f32 %v238, %v775
    %v798 = vsub.f32 %v314, %v778
    %v799 = vsub.f32 %v390, %v781
    %v800 = vsub.f32 %v466, %v784
    %v801 = vsub.f32 %v542, %v787
    %v802 = vsub.f32 %v618, %v790
    %v803 = vsub.f32 %v694, %v793
    %v804 = vsub.f32 %v770, %v796
    %v805 = vmul.f32 %v797, 1.442695
    %v806 = vpow.pop %v805
    %v807 = vmul.f32 %v798, 1.442695
    %v808 = vpow.pop %v807
    %v809 = vmul.f32 %v799, 1.442695
    %v810 = vpow.pop %v809
    %v811 = vmul.f32 %v800, 1.442695
    %v812 = vpow.pop %v811
    %v813 = vmul.f32 %v801, 1.442695
    %v814 = vpow.pop %v813
    %v815 = vmul.f32 %v802, 1.442695
    %v816 = vpow.pop %v815
    %v817 = vmul.f32 %v803, 1.442695
    %v818 = vpow.pop %v817
    %v819 = vmul.f32 %v804, 1.442695
    %v820 = vpow.pop %v819
    %v821 = vsel %vm166, %v806, 0.0
    %822 = vadd.xlane.f32.xlu0 %v821
    %v823 = vpop.xlane.xlu0 %822
    %v824 = vsel %vm166, %v808, 0.0
    %825 = vadd.xlane.f32.xlu0 %v824
    %v826 = vpop.xlane.xlu0 %825
    %v827 = vsel %vm166, %v810, 0.0
    %828 = vadd.xlane.f32.xlu0 %v827
    %v829 = vpop.xlane.xlu0 %828
    %v830 = vsel %vm166, %v812, 0.0
    %831 = vadd.xlane.f32.xlu0 %v830
    %v832 = vpop.xlane.xlu0 %831
    %v833 = vsel %vm166, %v814, 0.0
    %834 = vadd.xlane.f32.xlu0 %v833
    %v835 = vpop.xlane.xlu0 %834
    %v836 = vsel %vm166, %v816, 0.0
    %837 = vadd.xlane.f32.xlu0 %v836
    %v838 = vpop.xlane.xlu0 %837
    %v839 = vsel %vm166, %v818, 0.0
    %840 = vadd.xlane.f32.xlu0 %v839
    %v841 = vpop.xlane.xlu0 %840
    %v842 = vsel %vm166, %v820, 0.0
    %843 = vadd.xlane.f32.xlu0 %v842
    %v844 = vpop.xlane.xlu0 %843
    %v845 = vrcp.pop %v823
    %v846 = vrcp.pop %v826
    %v847 = vrcp.pop %v829
    %v848 = vrcp.pop %v832
    %v849 = vrcp.pop %v835
    %v850 = vrcp.pop %v838
    %v851 = vrcp.pop %v841
    %v852 = vrcp.pop %v844
    %v853 = vmul.f32 %v806, %v845
    %v854 = vmul.f32 %v808, %v846
    %v855 = vmul.f32 %v810, %v847
    %v856 = vmul.f32 %v812, %v848
    %v857 = vmul.f32 %v814, %v849
    %v858 = vmul.f32 %v816, %v850
    %v859 = vmul.f32 %v818, %v851
    %v860 = vmul.f32 %v820, %v852
    %863 = vrot.lane.b32.xlu0 %v855, 8
    %v864 = vpop.permute.xlu0 %863
    %865 = vrot.lane.b32.xlu0 %v856, 8
    %v866 = vpop.permute.xlu0 %865
    %871 = vrot.lane.b32.xlu0 %v857, 16
    %v872 = vpop.permute.xlu0 %871
    %873 = vrot.lane.b32.xlu0 %v858, 16
    %v874 = vpop.permute.xlu0 %873
    %879 = vrot.lane.b32.xlu0 %v859, 24
    %v880 = vpop.permute.xlu0 %879
    %881 = vrot.lane.b32.xlu0 %v860, 24
    %v882 = vpop.permute.xlu0 %881
    %v885 = vsel %vm166, %v853, %v864
    %v886 = vsel %vm166, %v854, %v866
    %vm887 = vcmask 130048
    %v888 = vsel %vm887, %v885, %v872
    %v889 = vsel %vm887, %v886, %v874
    %vm890 = vcmask 195584
    %v891 = vsel %vm890, %v888, %v880
    %v892 = vsel %vm890, %v889, %v882
    %893 = vst.msk [vmem:[#allocation9] sm:$0xff] %vm68, %v891
    %894 = vst.msk [vmem:[#allocation9 + $0x8] sm:$0xff] %vm68, %v892
    %895 = vrot.lane.b32.xlu0 %v142, 64
    %v896 = vpop.permute.xlu0 %895
    %v899 = vsel %vm166, %v853, 0
    %901 = vmatprep.subr.mxu0 0.0
    %902 = vmatpush1.msra.mxu0 %v896
    %903 = vmatprep.subr.mxu0 0.0
    %904 = vmatpush1.msra.mxu0 0.0
    %905 = vmatprep.subr.mxu0 0.0
    %906 = vmatpush1.msra.mxu0 0.0
    %907 = vmatprep.subr.mxu0 0.0
    %908 = vmatpush1.msra.mxu0 0.0
    %909 = vmatprep.subr.mxu0 0.0
    %910 = vmatpush1.msra.mxu0 0.0
    %911 = vmatprep.subr.mxu0 0.0
    %912 = vmatpush1.msra.mxu0 0.0
    %913 = vmatprep.subr.mxu0 0.0
    %914 = vmatpush1.msra.mxu0 0.0
    %915 = vmatprep.subr.mxu0 0.0
    %916 = vmatpush1.msra.mxu0 0.0
    %917 = vmatprep.subr.mxu0 0.0
    %918 = vmatpush1.msra.mxu0 0.0
    %919 = vmatprep.subr.mxu0 0.0
    %920 = vmatpush1.msra.mxu0 0.0
    %921 = vmatprep.subr.mxu0 0.0
    %922 = vmatpush1.msra.mxu0 0.0
    %923 = vmatprep.subr.mxu0 0.0
    %924 = vmatpush1.msra.mxu0 0.0
    %925 = vmatprep.subr.mxu0 0.0
    %926 = vmatpush1.msra.mxu0 0.0
    %927 = vmatprep.subr.mxu0 0.0
    %928 = vmatpush1.msra.mxu0 0.0
    %929 = vmatprep.subr.mxu0 0.0
    %930 = vmatpush1.msra.mxu0 0.0
    %931 = vmatprep.subr.mxu0 0.0
    %932 = vmatpush1.msra.mxu0 0.0
    %933 = vmatprep.subr.mxu0 0.0
    %934 = vmatpush1.msra.mxu0 0.0
    %935 = vmatprep.subr.mxu0 0.0
    %936 = vmatpush1.msra.mxu0 0.0
    %937 = vmatprep.subr.mxu0 0.0
    %938 = vmatpush1.msra.mxu0 0.0
    %939 = vmatprep.subr.mxu0 0.0
    %940 = vmatpush1.msra.mxu0 0.0
    %941 = vmatprep.subr.mxu0 0.0
    %942 = vmatpush1.msra.mxu0 0.0
    %943 = vmatprep.subr.mxu0 0.0
    %944 = vmatpush1.msra.mxu0 0.0
    %945 = vmatprep.subr.mxu0 0.0
    %946 = vmatpush1.msra.mxu0 0.0
    %947 = vmatprep.subr.mxu0 0.0
    %948 = vmatpush1.msra.mxu0 0.0
    %949 = vmatprep.subr.mxu0 0.0
    %950 = vmatpush1.msra.mxu0 0.0
    %951 = vmatprep.subr.mxu0 0.0
    %952 = vmatpush1.msra.mxu0 0.0
    %953 = vmatprep.subr.mxu0 0.0
    %954 = vmatpush1.msra.mxu0 0.0
    %955 = vmatprep.subr.mxu0 0.0
    %956 = vmatpush1.msra.mxu0 0.0
    %957 = vmatprep.subr.mxu0 0.0
    %958 = vmatpush1.msra.mxu0 0.0
    %959 = vmatprep.subr.mxu0 0.0
    %960 = vmatpush1.msra.mxu0 0.0
    %961 = vmatprep.subr.mxu0 0.0
    %962 = vmatpush1.msra.mxu0 0.0
    %963 = vmatprep.subr.mxu0 0.0
    %964 = vmatpush1.msra.mxu0 0.0
    %965 = vmatprep.mubr.f32.mxu0 0.0
    %966 = vmatmul.mubr.f32.gmra.mrb[0].mxu0 %v899
    %v967 = vpop.f32.mrb[0].mxu0
    %v968 = vadd.f32 0.0, %v967
    %v969 = vpop.f32.mrb[0].mxu0
    %970 = vdwg.mxu0
    %971 = vrot.lane.b32.xlu0 %v147, 64
    %v972 = vpop.permute.xlu0 %971
    %v975 = vsel %vm166, %v854, 0
    %977 = vmatprep.subr.mxu0 0.0
    %978 = vmatpush1.msra.mxu0 %v972
    %979 = vmatprep.subr.mxu0 0.0
    %980 = vmatpush1.msra.mxu0 0.0
    %981 = vmatprep.subr.mxu0 0.0
    %982 = vmatpush1.msra.mxu0 0.0
    %983 = vmatprep.subr.mxu0 0.0
    %984 = vmatpush1.msra.mxu0 0.0
    %985 = vmatprep.subr.mxu0 0.0
    %986 = vmatpush1.msra.mxu0 0.0
    %987 = vmatprep.subr.mxu0 0.0
    %988 = vmatpush1.msra.mxu0 0.0
    %989 = vmatprep.subr.mxu0 0.0
    %990 = vmatpush1.msra.mxu0 0.0
    %991 = vmatprep.subr.mxu0 0.0
    %992 = vmatpush1.msra.mxu0 0.0
    %993 = vmatprep.subr.mxu0 0.0
    %994 = vmatpush1.msra.mxu0 0.0
    %995 = vmatprep.subr.mxu0 0.0
    %996 = vmatpush1.msra.mxu0 0.0
    %997 = vmatprep.subr.mxu0 0.0
    %998 = vmatpush1.msra.mxu0 0.0
    %999 = vmatprep.subr.mxu0 0.0
    %1000 = vmatpush1.msra.mxu0 0.0
    %1001 = vmatprep.subr.mxu0 0.0
    %1002 = vmatpush1.msra.mxu0 0.0
    %1003 = vmatprep.subr.mxu0 0.0
    %1004 = vmatpush1.msra.mxu0 0.0
    %1005 = vmatprep.subr.mxu0 0.0
    %1006 = vmatpush1.msra.mxu0 0.0
    %1007 = vmatprep.subr.mxu0 0.0
    %1008 = vmatpush1.msra.mxu0 0.0
    %1009 = vmatprep.subr.mxu0 0.0
    %1010 = vmatpush1.msra.mxu0 0.0
    %1011 = vmatprep.subr.mxu0 0.0
    %1012 = vmatpush1.msra.mxu0 0.0
    %1013 = vmatprep.subr.mxu0 0.0
    %1014 = vmatpush1.msra.mxu0 0.0
    %1015 = vmatprep.subr.mxu0 0.0
    %1016 = vmatpush1.msra.mxu0 0.0
    %1017 = vmatprep.subr.mxu0 0.0
    %1018 = vmatpush1.msra.mxu0 0.0
    %1019 = vmatprep.subr.mxu0 0.0
    %1020 = vmatpush1.msra.mxu0 0.0
    %1021 = vmatprep.subr.mxu0 0.0
    %1022 = vmatpush1.msra.mxu0 0.0
    %1023 = vmatprep.subr.mxu0 0.0
    %1024 = vmatpush1.msra.mxu0 0.0
    %1025 = vmatprep.subr.mxu0 0.0
    %1026 = vmatpush1.msra.mxu0 0.0
    %1027 = vmatprep.subr.mxu0 0.0
    %1028 = vmatpush1.msra.mxu0 0.0
    %1029 = vmatprep.subr.mxu0 0.0
    %1030 = vmatpush1.msra.mxu0 0.0
    %1031 = vmatprep.subr.mxu0 0.0
    %1032 = vmatpush1.msra.mxu0 0.0
    %1033 = vmatprep.subr.mxu0 0.0
    %1034 = vmatpush1.msra.mxu0 0.0
    %1035 = vmatprep.subr.mxu0 0.0
    %1036 = vmatpush1.msra.mxu0 0.0
    %1037 = vmatprep.subr.mxu0 0.0
    %1038 = vmatpush1.msra.mxu0 0.0
    %1039 = vmatprep.subr.mxu0 0.0
    %1040 = vmatpush1.msra.mxu0 0.0
    %1041 = vmatprep.mubr.f32.mxu0 0.0
    %1042 = vmatmul.mubr.f32.gmra.mrb[0].mxu0 %v975
    %v1043 = vpop.f32.mrb[0].mxu0
    %v1044 = vadd.f32 0.0, %v1043
    %v1045 = vpop.f32.mrb[0].mxu0
    %1046 = vdwg.mxu0
    %1047 = vrot.lane.b32.xlu0 %v153, 64
    %v1048 = vpop.permute.xlu0 %1047
    %v1050 = vsel %vm166, %v855, 0
    %1052 = vmatprep.subr.mxu0 0.0
    %1053 = vmatpush1.msra.mxu0 %v1048
    %1054 = vmatprep.subr.mxu0 0.0
    %1055 = vmatpush1.msra.mxu0 0.0
    %1056 = vmatprep.subr.mxu0 0.0
    %1057 = vmatpush1.msra.mxu0 0.0
    %1058 = vmatprep.subr.mxu0 0.0
    %1059 = vmatpush1.msra.mxu0 0.0
    %1060 = vmatprep.subr.mxu0 0.0
    %1061 = vmatpush1.msra.mxu0 0.0
    %1062 = vmatprep.subr.mxu0 0.0
    %1063 = vmatpush1.msra.mxu0 0.0
    %1064 = vmatprep.subr.mxu0 0.0
    %1065 = vmatpush1.msra.mxu0 0.0
    %1066 = vmatprep.subr.mxu0 0.0
    %1067 = vmatpush1.msra.mxu0 0.0
    %1068 = vmatprep.subr.mxu0 0.0
    %1069 = vmatpush1.msra.mxu0 0.0
    %1070 = vmatprep.subr.mxu0 0.0
    %1071 = vmatpush1.msra.mxu0 0.0
    %1072 = vmatprep.subr.mxu0 0.0
    %1073 = vmatpush1.msra.mxu0 0.0
    %1074 = vmatprep.subr.mxu0 0.0
    %1075 = vmatpush1.msra.mxu0 0.0
    %1076 = vmatprep.subr.mxu0 0.0
    %1077 = vmatpush1.msra.mxu0 0.0
    %1078 = vmatprep.subr.mxu0 0.0
    %1079 = vmatpush1.msra.mxu0 0.0
    %1080 = vmatprep.subr.mxu0 0.0
    %1081 = vmatpush1.msra.mxu0 0.0
    %1082 = vmatprep.subr.mxu0 0.0
    %1083 = vmatpush1.msra.mxu0 0.0
    %1084 = vmatprep.subr.mxu0 0.0
    %1085 = vmatpush1.msra.mxu0 0.0
    %1086 = vmatprep.subr.mxu0 0.0
    %1087 = vmatpush1.msra.mxu0 0.0
    %1088 = vmatprep.subr.mxu0 0.0
    %1089 = vmatpush1.msra.mxu0 0.0
    %1090 = vmatprep.subr.mxu0 0.0
    %1091 = vmatpush1.msra.mxu0 0.0
    %1092 = vmatprep.subr.mxu0 0.0
    %1093 = vmatpush1.msra.mxu0 0.0
    %1094 = vmatprep.subr.mxu0 0.0
    %1095 = vmatpush1.msra.mxu0 0.0
    %1096 = vmatprep.subr.mxu0 0.0
    %1097 = vmatpush1.msra.mxu0 0.0
    %1098 = vmatprep.subr.mxu0 0.0
    %1099 = vmatpush1.msra.mxu0 0.0
    %1100 = vmatprep.subr.mxu0 0.0
    %1101 = vmatpush1.msra.mxu0 0.0
    %1102 = vmatprep.subr.mxu0 0.0
    %1103 = vmatpush1.msra.mxu0 0.0
    %1104 = vmatprep.subr.mxu0 0.0
    %1105 = vmatpush1.msra.mxu0 0.0
    %1106 = vmatprep.subr.mxu0 0.0
    %1107 = vmatpush1.msra.mxu0 0.0
    %1108 = vmatprep.subr.mxu0 0.0
    %1109 = vmatpush1.msra.mxu0 0.0
    %1110 = vmatprep.subr.mxu0 0.0
    %1111 = vmatpush1.msra.mxu0 0.0
    %1112 = vmatprep.subr.mxu0 0.0
    %1113 = vmatpush1.msra.mxu0 0.0
    %1114 = vmatprep.subr.mxu0 0.0
    %1115 = vmatpush1.msra.mxu0 0.0
    %1116 = vmatprep.mubr.f32.mxu0 0.0
    %1117 = vmatmul.mubr.f32.gmra.mrb[0].mxu0 %v1050
    %v1118 = vpop.f32.mrb[0].mxu0
    %v1119 = vadd.f32 0.0, %v1118
    %v1120 = vpop.f32.mrb[0].mxu0
    %1121 = vdwg.mxu0
    %1122 = vrot.lane.b32.xlu0 %v155, 64
    %v1123 = vpop.permute.xlu0 %1122
    %v1125 = vsel %vm166, %v856, 0
    %1127 = vmatprep.subr.mxu0 0.0
    %1128 = vmatpush1.msra.mxu0 %v1123
    %1129 = vmatprep.subr.mxu0 0.0
    %1130 = vmatpush1.msra.mxu0 0.0
    %1131 = vmatprep.subr.mxu0 0.0
    %1132 = vmatpush1.msra.mxu0 0.0
    %1133 = vmatprep.subr.mxu0 0.0
    %1134 = vmatpush1.msra.mxu0 0.0
    %1135 = vmatprep.subr.mxu0 0.0
    %1136 = vmatpush1.msra.mxu0 0.0
    %1137 = vmatprep.subr.mxu0 0.0
    %1138 = vmatpush1.msra.mxu0 0.0
    %1139 = vmatprep.subr.mxu0 0.0
    %1140 = vmatpush1.msra.mxu0 0.0
    %1141 = vmatprep.subr.mxu0 0.0
    %1142 = vmatpush1.msra.mxu0 0.0
    %1143 = vmatprep.subr.mxu0 0.0
    %1144 = vmatpush1.msra.mxu0 0.0
    %1145 = vmatprep.subr.mxu0 0.0
    %1146 = vmatpush1.msra.mxu0 0.0
    %1147 = vmatprep.subr.mxu0 0.0
    %1148 = vmatpush1.msra.mxu0 0.0
    %1149 = vmatprep.subr.mxu0 0.0
    %1150 = vmatpush1.msra.mxu0 0.0
    %1151 = vmatprep.subr.mxu0 0.0
    %1152 = vmatpush1.msra.mxu0 0.0
    %1153 = vmatprep.subr.mxu0 0.0
    %1154 = vmatpush1.msra.mxu0 0.0
    %1155 = vmatprep.subr.mxu0 0.0
    %1156 = vmatpush1.msra.mxu0 0.0
    %1157 = vmatprep.subr.mxu0 0.0
    %1158 = vmatpush1.msra.mxu0 0.0
    %1159 = vmatprep.subr.mxu0 0.0
    %1160 = vmatpush1.msra.mxu0 0.0
    %1161 = vmatprep.subr.mxu0 0.0
    %1162 = vmatpush1.msra.mxu0 0.0
    %1163 = vmatprep.subr.mxu0 0.0
    %1164 = vmatpush1.msra.mxu0 0.0
    %1165 = vmatprep.subr.mxu0 0.0
    %1166 = vmatpush1.msra.mxu0 0.0
    %1167 = vmatprep.subr.mxu0 0.0
    %1168 = vmatpush1.msra.mxu0 0.0
    %1169 = vmatprep.subr.mxu0 0.0
    %1170 = vmatpush1.msra.mxu0 0.0
    %1171 = vmatprep.subr.mxu0 0.0
    %1172 = vmatpush1.msra.mxu0 0.0
    %1173 = vmatprep.subr.mxu0 0.0
    %1174 = vmatpush1.msra.mxu0 0.0
    %1175 = vmatprep.subr.mxu0 0.0
    %1176 = vmatpush1.msra.mxu0 0.0
    %1177 = vmatprep.subr.mxu0 0.0
    %1178 = vmatpush1.msra.mxu0 0.0
    %1179 = vmatprep.subr.mxu0 0.0
    %1180 = vmatpush1.msra.mxu0 0.0
    %1181 = vmatprep.subr.mxu0 0.0
    %1182 = vmatpush1.msra.mxu0 0.0
    %1183 = vmatprep.subr.mxu0 0.0
    %1184 = vmatpush1.msra.mxu0 0.0
    %1185 = vmatprep.subr.mxu0 0.0
    %1186 = vmatpush1.msra.mxu0 0.0
    %1187 = vmatprep.subr.mxu0 0.0
    %1188 = vmatpush1.msra.mxu0 0.0
    %1189 = vmatprep.subr.mxu0 0.0
    %1190 = vmatpush1.msra.mxu0 0.0
    %1191 = vmatprep.mubr.f32.mxu0 0.0
    %1192 = vmatmul.mubr.f32.gmra.mrb[0].mxu0 %v1125
    %v1193 = vpop.f32.mrb[0].mxu0
    %v1194 = vadd.f32 0.0, %v1193
    %v1195 = vpop.f32.mrb[0].mxu0
    %1196 = vdwg.mxu0
    %1197 = vrot.lane.b32.xlu0 %v157, 64
    %v1198 = vpop.permute.xlu0 %1197
    %v1200 = vsel %vm166, %v857, 0
    %1202 = vmatprep.subr.mxu0 0.0
    %1203 = vmatpush1.msra.mxu0 %v1198
    %1204 = vmatprep.subr.mxu0 0.0
    %1205 = vmatpush1.msra.mxu0 0.0
    %1206 = vmatprep.subr.mxu0 0.0
    %1207 = vmatpush1.msra.mxu0 0.0
    %1208 = vmatprep.subr.mxu0 0.0
    %1209 = vmatpush1.msra.mxu0 0.0
    %1210 = vmatprep.subr.mxu0 0.0
    %1211 = vmatpush1.msra.mxu0 0.0
    %1212 = vmatprep.subr.mxu0 0.0
    %1213 = vmatpush1.msra.mxu0 0.0
    %1214 = vmatprep.subr.mxu0 0.0
    %1215 = vmatpush1.msra.mxu0 0.0
    %1216 = vmatprep.subr.mxu0 0.0
    %1217 = vmatpush1.msra.mxu0 0.0
    %1218 = vmatprep.subr.mxu0 0.0
    %1219 = vmatpush1.msra.mxu0 0.0
    %1220 = vmatprep.subr.mxu0 0.0
    %1221 = vmatpush1.msra.mxu0 0.0
    %1222 = vmatprep.subr.mxu0 0.0
    %1223 = vmatpush1.msra.mxu0 0.0
    %1224 = vmatprep.subr.mxu0 0.0
    %1225 = vmatpush1.msra.mxu0 0.0
    %1226 = vmatprep.subr.mxu0 0.0
    %1227 = vmatpush1.msra.mxu0 0.0
    %1228 = vmatprep.subr.mxu0 0.0
    %1229 = vmatpush1.msra.mxu0 0.0
    %1230 = vmatprep.subr.mxu0 0.0
    %1231 = vmatpush1.msra.mxu0 0.0
    %1232 = vmatprep.subr.mxu0 0.0
    %1233 = vmatpush1.msra.mxu0 0.0
    %1234 = vmatprep.subr.mxu0 0.0
    %1235 = vmatpush1.msra.mxu0 0.0
    %1236 = vmatprep.subr.mxu0 0.0
    %1237 = vmatpush1.msra.mxu0 0.0
    %1238 = vmatprep.subr.mxu0 0.0
    %1239 = vmatpush1.msra.mxu0 0.0
    %1240 = vmatprep.subr.mxu0 0.0
    %1241 = vmatpush1.msra.mxu0 0.0
    %1242 = vmatprep.subr.mxu0 0.0
    %1243 = vmatpush1.msra.mxu0 0.0
    %1244 = vmatprep.subr.mxu0 0.0
    %1245 = vmatpush1.msra.mxu0 0.0
    %1246 = vmatprep.subr.mxu0 0.0
    %1247 = vmatpush1.msra.mxu0 0.0
    %1248 = vmatprep.subr.mxu0 0.0
    %1249 = vmatpush1.msra.mxu0 0.0
    %1250 = vmatprep.subr.mxu0 0.0
    %1251 = vmatpush1.msra.mxu0 0.0
    %1252 = vmatprep.subr.mxu0 0.0
    %1253 = vmatpush1.msra.mxu0 0.0
    %1254 = vmatprep.subr.mxu0 0.0
    %1255 = vmatpush1.msra.mxu0 0.0
    %1256 = vmatprep.subr.mxu0 0.0
    %1257 = vmatpush1.msra.mxu0 0.0
    %1258 = vmatprep.subr.mxu0 0.0
    %1259 = vmatpush1.msra.mxu0 0.0
    %1260 = vmatprep.subr.mxu0 0.0
    %1261 = vmatpush1.msra.mxu0 0.0
    %1262 = vmatprep.subr.mxu0 0.0
    %1263 = vmatpush1.msra.mxu0 0.0
    %1264 = vmatprep.subr.mxu0 0.0
    %1265 = vmatpush1.msra.mxu0 0.0
    %1266 = vmatprep.mubr.f32.mxu0 0.0
    %1267 = vmatmul.mubr.f32.gmra.mrb[0].mxu0 %v1200
    %v1268 = vpop.f32.mrb[0].mxu0
    %v1269 = vadd.f32 0.0, %v1268
    %v1270 = vpop.f32.mrb[0].mxu0
    %1271 = vdwg.mxu0
    %1272 = vrot.lane.b32.xlu0 %v159, 64
    %v1273 = vpop.permute.xlu0 %1272
    %v1275 = vsel %vm166, %v858, 0
    %1277 = vmatprep.subr.mxu0 0.0
    %1278 = vmatpush1.msra.mxu0 %v1273
    %1279 = vmatprep.subr.mxu0 0.0
    %1280 = vmatpush1.msra.mxu0 0.0
    %1281 = vmatprep.subr.mxu0 0.0
    %1282 = vmatpush1.msra.mxu0 0.0
    %1283 = vmatprep.subr.mxu0 0.0
    %1284 = vmatpush1.msra.mxu0 0.0
    %1285 = vmatprep.subr.mxu0 0.0
    %1286 = vmatpush1.msra.mxu0 0.0
    %1287 = vmatprep.subr.mxu0 0.0
    %1288 = vmatpush1.msra.mxu0 0.0
    %1289 = vmatprep.subr.mxu0 0.0
    %1290 = vmatpush1.msra.mxu0 0.0
    %1291 = vmatprep.subr.mxu0 0.0
    %1292 = vmatpush1.msra.mxu0 0.0
    %1293 = vmatprep.subr.mxu0 0.0
    %1294 = vmatpush1.msra.mxu0 0.0
    %1295 = vmatprep.subr.mxu0 0.0
    %1296 = vmatpush1.msra.mxu0 0.0
    %1297 = vmatprep.subr.mxu0 0.0
    %1298 = vmatpush1.msra.mxu0 0.0
    %1299 = vmatprep.subr.mxu0 0.0
    %1300 = vmatpush1.msra.mxu0 0.0
    %1301 = vmatprep.subr.mxu0 0.0
    %1302 = vmatpush1.msra.mxu0 0.0
    %1303 = vmatprep.subr.mxu0 0.0
    %1304 = vmatpush1.msra.mxu0 0.0
    %1305 = vmatprep.subr.mxu0 0.0
    %1306 = vmatpush1.msra.mxu0 0.0
    %1307 = vmatprep.subr.mxu0 0.0
    %1308 = vmatpush1.msra.mxu0 0.0
    %1309 = vmatprep.subr.mxu0 0.0
    %1310 = vmatpush1.msra.mxu0 0.0
    %1311 = vmatprep.subr.mxu0 0.0
    %1312 = vmatpush1.msra.mxu0 0.0
    %1313 = vmatprep.subr.mxu0 0.0
    %1314 = vmatpush1.msra.mxu0 0.0
    %1315 = vmatprep.subr.mxu0 0.0
    %1316 = vmatpush1.msra.mxu0 0.0
    %1317 = vmatprep.subr.mxu0 0.0
    %1318 = vmatpush1.msra.mxu0 0.0
    %1319 = vmatprep.subr.mxu0 0.0
    %1320 = vmatpush1.msra.mxu0 0.0
    %1321 = vmatprep.subr.mxu0 0.0
    %1322 = vmatpush1.msra.mxu0 0.0
    %1323 = vmatprep.subr.mxu0 0.0
    %1324 = vmatpush1.msra.mxu0 0.0
    %1325 = vmatprep.subr.mxu0 0.0
    %1326 = vmatpush1.msra.mxu0 0.0
    %1327 = vmatprep.subr.mxu0 0.0
    %1328 = vmatpush1.msra.mxu0 0.0
    %1329 = vmatprep.subr.mxu0 0.0
    %1330 = vmatpush1.msra.mxu0 0.0
    %1331 = vmatprep.subr.mxu0 0.0
    %1332 = vmatpush1.msra.mxu0 0.0
    %1333 = vmatprep.subr.mxu0 0.0
    %1334 = vmatpush1.msra.mxu0 0.0
    %1335 = vmatprep.subr.mxu0 0.0
    %1336 = vmatpush1.msra.mxu0 0.0
    %1337 = vmatprep.subr.mxu0 0.0
    %1338 = vmatpush1.msra.mxu0 0.0
    %1339 = vmatprep.subr.mxu0 0.0
    %1340 = vmatpush1.msra.mxu0 0.0
    %1341 = vmatprep.mubr.f32.mxu0 0.0
    %1342 = vmatmul.mubr.f32.gmra.mrb[0].mxu0 %v1275
    %v1343 = vpop.f32.mrb[0].mxu0
    %v1344 = vadd.f32 0.0, %v1343
    %v1345 = vpop.f32.mrb[0].mxu0
    %1346 = vdwg.mxu0
    %1347 = vrot.lane.b32.xlu0 %v161, 64
    %v1348 = vpop.permute.xlu0 %1347
    %v1350 = vsel %vm166, %v859, 0
    %1352 = vmatprep.subr.mxu0 0.0
    %1353 = vmatpush1.msra.mxu0 %v1348
    %1354 = vmatprep.subr.mxu0 0.0
    %1355 = vmatpush1.msra.mxu0 0.0
    %1356 = vmatprep.subr.mxu0 0.0
    %1357 = vmatpush1.msra.mxu0 0.0
    %1358 = vmatprep.subr.mxu0 0.0
    %1359 = vmatpush1.msra.mxu0 0.0
    %1360 = vmatprep.subr.mxu0 0.0
    %1361 = vmatpush1.msra.mxu0 0.0
    %1362 = vmatprep.subr.mxu0 0.0
    %1363 = vmatpush1.msra.mxu0 0.0
    %1364 = vmatprep.subr.mxu0 0.0
    %1365 = vmatpush1.msra.mxu0 0.0
    %1366 = vmatprep.subr.mxu0 0.0
    %1367 = vmatpush1.msra.mxu0 0.0
    %1368 = vmatprep.subr.mxu0 0.0
    %1369 = vmatpush1.msra.mxu0 0.0
    %1370 = vmatprep.subr.mxu0 0.0
    %1371 = vmatpush1.msra.mxu0 0.0
    %1372 = vmatprep.subr.mxu0 0.0
    %1373 = vmatpush1.msra.mxu0 0.0
    %1374 = vmatprep.subr.mxu0 0.0
    %1375 = vmatpush1.msra.mxu0 0.0
    %1376 = vmatprep.subr.mxu0 0.0
    %1377 = vmatpush1.msra.mxu0 0.0
    %1378 = vmatprep.subr.mxu0 0.0
    %1379 = vmatpush1.msra.mxu0 0.0
    %1380 = vmatprep.subr.mxu0 0.0
    %1381 = vmatpush1.msra.mxu0 0.0
    %1382 = vmatprep.subr.mxu0 0.0
    %1383 = vmatpush1.msra.mxu0 0.0
    %1384 = vmatprep.subr.mxu0 0.0
    %1385 = vmatpush1.msra.mxu0 0.0
    %1386 = vmatprep.subr.mxu0 0.0
    %1387 = vmatpush1.msra.mxu0 0.0
    %1388 = vmatprep.subr.mxu0 0.0
    %1389 = vmatpush1.msra.mxu0 0.0
    %1390 = vmatprep.subr.mxu0 0.0
    %1391 = vmatpush1.msra.mxu0 0.0
    %1392 = vmatprep.subr.mxu0 0.0
    %1393 = vmatpush1.msra.mxu0 0.0
    %1394 = vmatprep.subr.mxu0 0.0
    %1395 = vmatpush1.msra.mxu0 0.0
    %1396 = vmatprep.subr.mxu0 0.0
    %1397 = vmatpush1.msra.mxu0 0.0
    %1398 = vmatprep.subr.mxu0 0.0
    %1399 = vmatpush1.msra.mxu0 0.0
    %1400 = vmatprep.subr.mxu0 0.0
    %1401 = vmatpush1.msra.mxu0 0.0
    %1402 = vmatprep.subr.mxu0 0.0
    %1403 = vmatpush1.msra.mxu0 0.0
    %1404 = vmatprep.subr.mxu0 0.0
    %1405 = vmatpush1.msra.mxu0 0.0
    %1406 = vmatprep.subr.mxu0 0.0
    %1407 = vmatpush1.msra.mxu0 0.0
    %1408 = vmatprep.subr.mxu0 0.0
    %1409 = vmatpush1.msra.mxu0 0.0
    %1410 = vmatprep.subr.mxu0 0.0
    %1411 = vmatpush1.msra.mxu0 0.0
    %1412 = vmatprep.subr.mxu0 0.0
    %1413 = vmatpush1.msra.mxu0 0.0
    %1414 = vmatprep.subr.mxu0 0.0
    %1415 = vmatpush1.msra.mxu0 0.0
    %1416 = vmatprep.mubr.f32.mxu0 0.0
    %1417 = vmatmul.mubr.f32.gmra.mrb[0].mxu0 %v1350
    %v1418 = vpop.f32.mrb[0].mxu0
    %v1419 = vadd.f32 0.0, %v1418
    %v1420 = vpop.f32.mrb[0].mxu0
    %1421 = vdwg.mxu0
    %1422 = vrot.lane.b32.xlu0 %v163, 64
    %v1423 = vpop.permute.xlu0 %1422
    %v1425 = vsel %vm166, %v860, 0
    %1427 = vmatprep.subr.mxu0 0.0
    %1428 = vmatpush1.msra.mxu0 %v1423
    %1429 = vmatprep.subr.mxu0 0.0
    %1430 = vmatpush1.msra.mxu0 0.0
    %1431 = vmatprep.subr.mxu0 0.0
    %1432 = vmatpush1.msra.mxu0 0.0
    %1433 = vmatprep.subr.mxu0 0.0
    %1434 = vmatpush1.msra.mxu0 0.0
    %1435 = vmatprep.subr.mxu0 0.0
    %1436 = vmatpush1.msra.mxu0 0.0
    %1437 = vmatprep.subr.mxu0 0.0
    %1438 = vmatpush1.msra.mxu0 0.0
    %1439 = vmatprep.subr.mxu0 0.0
    %1440 = vmatpush1.msra.mxu0 0.0
    %1441 = vmatprep.subr.mxu0 0.0
    %1442 = vmatpush1.msra.mxu0 0.0
    %1443 = vmatprep.subr.mxu0 0.0
    %1444 = vmatpush1.msra.mxu0 0.0
    %1445 = vmatprep.subr.mxu0 0.0
    %1446 = vmatpush1.msra.mxu0 0.0
    %1447 = vmatprep.subr.mxu0 0.0
    %1448 = vmatpush1.msra.mxu0 0.0
    %1449 = vmatprep.subr.mxu0 0.0
    %1450 = vmatpush1.msra.mxu0 0.0
    %1451 = vmatprep.subr.mxu0 0.0
    %1452 = vmatpush1.msra.mxu0 0.0
    %1453 = vmatprep.subr.mxu0 0.0
    %1454 = vmatpush1.msra.mxu0 0.0
    %1455 = vmatprep.subr.mxu0 0.0
    %1456 = vmatpush1.msra.mxu0 0.0
    %1457 = vmatprep.subr.mxu0 0.0
    %1458 = vmatpush1.msra.mxu0 0.0
    %1459 = vmatprep.subr.mxu0 0.0
    %1460 = vmatpush1.msra.mxu0 0.0
    %1461 = vmatprep.subr.mxu0 0.0
    %1462 = vmatpush1.msra.mxu0 0.0
    %1463 = vmatprep.subr.mxu0 0.0
    %1464 = vmatpush1.msra.mxu0 0.0
    %1465 = vmatprep.subr.mxu0 0.0
    %1466 = vmatpush1.msra.mxu0 0.0
    %1467 = vmatprep.subr.mxu0 0.0
    %1468 = vmatpush1.msra.mxu0 0.0
    %1469 = vmatprep.subr.mxu0 0.0
    %1470 = vmatpush1.msra.mxu0 0.0
    %1471 = vmatprep.subr.mxu0 0.0
    %1472 = vmatpush1.msra.mxu0 0.0
    %1473 = vmatprep.subr.mxu0 0.0
    %1474 = vmatpush1.msra.mxu0 0.0
    %1475 = vmatprep.subr.mxu0 0.0
    %1476 = vmatpush1.msra.mxu0 0.0
    %1477 = vmatprep.subr.mxu0 0.0
    %1478 = vmatpush1.msra.mxu0 0.0
    %1479 = vmatprep.subr.mxu0 0.0
    %1480 = vmatpush1.msra.mxu0 0.0
    %1481 = vmatprep.subr.mxu0 0.0
    %1482 = vmatpush1.msra.mxu0 0.0
    %1483 = vmatprep.subr.mxu0 0.0
    %1484 = vmatpush1.msra.mxu0 0.0
    %1485 = vmatprep.subr.mxu0 0.0
    %1486 = vmatpush1.msra.mxu0 0.0
    %1487 = vmatprep.subr.mxu0 0.0
    %1488 = vmatpush1.msra.mxu0 0.0
    %1489 = vmatprep.subr.mxu0 0.0
    %1490 = vmatpush1.msra.mxu0 0.0
    %1491 = vmatprep.mubr.f32.mxu0 0.0
    %1492 = vmatmul.mubr.f32.gmra.mrb[0].mxu0 %v1425
    %v1493 = vpop.f32.mrb[0].mxu0
    %v1494 = vadd.f32 0.0, %v1493
    %v1495 = vpop.f32.mrb[0].mxu0
    %1496 = vdwg.mxu0
    %1499 = vrot.lane.b32.xlu0 %v1119, 8
    %v1500 = vpop.permute.xlu0 %1499
    %1501 = vrot.lane.b32.xlu0 %v1194, 8
    %v1502 = vpop.permute.xlu0 %1501
    %1507 = vrot.lane.b32.xlu0 %v1269, 16
    %v1508 = vpop.permute.xlu0 %1507
    %1509 = vrot.lane.b32.xlu0 %v1344, 16
    %v1510 = vpop.permute.xlu0 %1509
    %1515 = vrot.lane.b32.xlu0 %v1419, 24
    %v1516 = vpop.permute.xlu0 %1515
    %1517 = vrot.lane.b32.xlu0 %v1494, 24
    %v1518 = vpop.permute.xlu0 %1517
    %v1521 = vsel %vm166, %v968, %v1500
    %v1522 = vsel %vm166, %v1044, %v1502
    %v1523 = vsel %vm887, %v1521, %v1508
    %v1524 = vsel %vm887, %v1522, %v1510
    %v1525 = vsel %vm890, %v1523, %v1516
    %v1526 = vsel %vm890, %v1524, %v1518
    %v1527 = vld [vmem:[#allocation7] sm:$0xff]
    %v1528 = vld [vmem:[#allocation7 + $0x8] sm:$0xff]
    %v1529 = vld [vmem:[#allocation7 + $0x10] sm:$0xff]
    %v1530 = vld [vmem:[#allocation7 + $0x18] sm:$0xff]
    %v1531 = vld [vmem:[%s3] sm:$0x1]
    %v1533 = vlaneseq
    %v1534 = vshrl.u32 %v1533, 7
    %v1535 = vsub.s32 0, %v1534
    %v1536 = vrot.slane %v1531, %v1535
    %v1539 = vsel %vm68, %v1525, 0
    %v1542 = vsel %vm68, %v1526, 0
    %1544 = vmatprep.subr.mxu0 0.0
    %1545 = vmatpush1.msra.mxu0 %v1527
    %1546 = vmatprep.subr.mxu0 0.0
    %1547 = vmatpush1.msra.mxu0 %v1528
    %1548 = vmatprep.subr.mxu0 0.0
    %1549 = vmatpush1.msra.mxu0 %v1529
    %1550 = vmatprep.subr.mxu0 0.0
    %1551 = vmatpush1.msra.mxu0 %v1530
    %1552 = vmatprep.subr.mxu0 0.0
    %1553 = vmatpush1.msra.mxu0 0.0
    %1554 = vmatprep.subr.mxu0 0.0
    %1555 = vmatpush1.msra.mxu0 0.0
    %1556 = vmatprep.subr.mxu0 0.0
    %1557 = vmatpush1.msra.mxu0 0.0
    %1558 = vmatprep.subr.mxu0 0.0
    %1559 = vmatpush1.msra.mxu0 0.0
    %1560 = vmatprep.subr.mxu0 0.0
    %1561 = vmatpush1.msra.mxu0 0.0
    %1562 = vmatprep.subr.mxu0 0.0
    %1563 = vmatpush1.msra.mxu0 0.0
    %1564 = vmatprep.subr.mxu0 0.0
    %1565 = vmatpush1.msra.mxu0 0.0
    %1566 = vmatprep.subr.mxu0 0.0
    %1567 = vmatpush1.msra.mxu0 0.0
    %1568 = vmatprep.subr.mxu0 0.0
    %1569 = vmatpush1.msra.mxu0 0.0
    %1570 = vmatprep.subr.mxu0 0.0
    %1571 = vmatpush1.msra.mxu0 0.0
    %1572 = vmatprep.subr.mxu0 0.0
    %1573 = vmatpush1.msra.mxu0 0.0
    %1574 = vmatprep.subr.mxu0 0.0
    %1575 = vmatpush1.msra.mxu0 0.0
    %1576 = vmatprep.subr.mxu0 0.0
    %1577 = vmatpush1.msra.mxu0 0.0
    %1578 = vmatprep.subr.mxu0 0.0
    %1579 = vmatpush1.msra.mxu0 0.0
    %1580 = vmatprep.subr.mxu0 0.0
    %1581 = vmatpush1.msra.mxu0 0.0
    %1582 = vmatprep.subr.mxu0 0.0
    %1583 = vmatpush1.msra.mxu0 0.0
    %1584 = vmatprep.subr.mxu0 0.0
    %1585 = vmatpush1.msra.mxu0 0.0
    %1586 = vmatprep.subr.mxu0 0.0
    %1587 = vmatpush1.msra.mxu0 0.0
    %1588 = vmatprep.subr.mxu0 0.0
    %1589 = vmatpush1.msra.mxu0 0.0
    %1590 = vmatprep.subr.mxu0 0.0
    %1591 = vmatpush1.msra.mxu0 0.0
    %1592 = vmatprep.subr.mxu0 0.0
    %1593 = vmatpush1.msra.mxu0 0.0
    %1594 = vmatprep.subr.mxu0 0.0
    %1595 = vmatpush1.msra.mxu0 0.0
    %1596 = vmatprep.subr.mxu0 0.0
    %1597 = vmatpush1.msra.mxu0 0.0
    %1598 = vmatprep.subr.mxu0 0.0
    %1599 = vmatpush1.msra.mxu0 0.0
    %1600 = vmatprep.subr.mxu0 0.0
    %1601 = vmatpush1.msra.mxu0 0.0
    %1602 = vmatprep.subr.mxu0 0.0
    %1603 = vmatpush1.msra.mxu0 0.0
    %1604 = vmatprep.subr.mxu0 0.0
    %1605 = vmatpush1.msra.mxu0 0.0
    %1606 = vmatprep.subr.mxu0 0.0
    %1607 = vmatpush1.msra.mxu0 0.0
    %1608 = vmatprep.mubr.f32.mxu0 0.0
    %1609 = vmatmul.mubr.f32.gmra.mrb[0].mxu0 %v1539
    %v1610 = vpop.f32.mrb[0].mxu0
    %v1611 = vadd.f32 %v1536, %v1610
    %v1612 = vpop.f32.mrb[0].mxu0
    %1613 = vmatprep.mubr.f32.mxu0 0.0
    %1614 = vmatmul.mubr.f32.gmra.mrb[0].mxu0 %v1542
    %v1615 = vpop.f32.mrb[0].mxu0
    %v1616 = vadd.f32 %v1536, %v1615
    %v1617 = vpop.f32.mrb[0].mxu0
    %1618 = vdwg.mxu0
    %1619 = vst.msk [vmem:[#allocation8] sm:$0xff] %vm68, %v1611
    %1620 = vst.msk [vmem:[#allocation8 + $0x8] sm:$0xff] %vm68, %v1616
    // Predicated region
    $region30: #{tpu_custom_call.1} parent=1 // pred_check
      _
    $region31: #{tpu_custom_call.1} parent=1 // pred_check_branch
      %1622 = sbr.rel (0) target = $region33
    $region32: #{tpu_custom_call.1} parent=1 // pred_region
      %s1624 = ssub.s32 256, 256
      %1625 = vsyncadd [#allocation4], %s1624
      %s1626 = sshll.u32 [#allocation8], 4
      %s1627 = int_to_ptr.vmem [resolvable:$true] %s1626
      %1632 = dma.vmem_to_hbm [thread:$0]  %s1627, 256, %s4, [#allocation4], 128, 128, 8
    $region33: #{tpu_custom_call.1} parent=1 // pred_fallthru
      _
    // Predicated region
    $region34: #{tpu_custom_call.1} parent=1 // pred_check
      _
    $region35: #{tpu_custom_call.1} parent=1 // pred_check_branch
      %1634 = sbr.rel (0) target = $region37
    $region36: #{tpu_custom_call.1} parent=1 // pred_region
      %s1636 = ssub.s32 256, 256
      %1637 = vsyncadd [#allocation10], %s1636
      %s1638 = sshll.u32 [#allocation9], 4
      %s1639 = int_to_ptr.vmem [resolvable:$true] %s1638
      %1644 = dma.vmem_to_hbm [thread:$0]  %s1639, 256, %s5, [#allocation10], 128, 128, 8
    $region37: #{tpu_custom_call.1} parent=1 // pred_fallthru
      _
    // Predicated region
    $region38: #{tpu_custom_call.1} parent=1 // pred_check
      _
    $region39: #{tpu_custom_call.1} parent=1 // pred_check_branch
      %1646 = sbr.rel (0) target = $region41
    $region40: #{tpu_custom_call.1} parent=1 // pred_region
      %1647 = dma.done [#allocation4], 256
    $region41: #{tpu_custom_call.1} parent=1 // pred_fallthru
      _
    // Predicated region
    $region42: #{tpu_custom_call.1} parent=1 // pred_check
      _
    $region43: #{tpu_custom_call.1} parent=1 // pred_check_branch
      %1649 = sbr.rel (0) target = $region45
    $region44: #{tpu_custom_call.1} parent=1 // pred_region
      %1650 = dma.done [#allocation10], 256
    $region45: #{tpu_custom_call.1} parent=1 // pred_fallthru
      _
    %1651 = vsyncpa [#allocation3], 1
    %1652 = vsyncpa [#allocation6], 1
    %1653 = vsyncpa [#allocation4], 1
    %1654 = vsyncpa [#allocation10], 1

</llo_original>
